<compile_context>
chip_gen: v5e
topology: v5e:2x2
jax: 0.10.0
libtpu: 0.0.40
codegen_flags: <defaults>
</compile_context>

<pallas_src>
import functools
import math

import jax
import jax.numpy as jnp
import numpy as np
from jax.experimental import pallas as pl
from jax.experimental.pallas import tpu as pltpu

LN_EPS = 1e-5


# ---------------------------------------------------------------------------
# shared math helpers (usable both inside kernels and in the pure-JAX reference)
# ---------------------------------------------------------------------------
def _layernorm(x, w):
    # F.layer_norm(x.float(), [dim]) * weight  (no bias, eps=1e-5)
    mu = jnp.mean(x, axis=-1, keepdims=True)
    xc = x - mu
    var = jnp.mean(xc * xc, axis=-1, keepdims=True)
    return xc * jax.lax.rsqrt(var + LN_EPS) * w


def _gelu_tanh(x):
    c = 0.7978845608028654  # sqrt(2/pi)
    return 0.5 * x * (1.0 + jnp.tanh(c * (x + 0.044715 * x * x * x)))


def _compiler_params(semantics, est_bytes):
    # explicit scoped-VMEM budget: footprint*2 + headroom, floored at 32 MiB
    # (>= default on all generations), capped well below v5e/v6e physical.
    vmem = int(min(max(2 * int(est_bytes) + (8 << 20), 32 << 20), 96 << 20))
    return pltpu.CompilerParams(dimension_semantics=semantics,
                                vmem_limit_bytes=vmem)


# ---------------------------------------------------------------------------
# Pallas kernel: DDiT block, attention half (one batch element per grid step)
# ---------------------------------------------------------------------------
def ddit_attn_kernel(x_ref, mods_ref, cos_ref, sin_ref,
                     ln1_ref, wqkv_ref, wo_ref,
                     o_ref, attn_acc, *, n_heads):
    S, D = x_ref.shape[1], x_ref.shape[2]
    Dh = D // n_heads
    half = Dh // 2

    x = x_ref[0]                       # [S, D] f32
    m = mods_ref[0]                    # [3, D]: shift_msa, scale_msa, gate_msa
    shift_msa = m[0:1]
    scale_msa = 1.0 + m[1:2]           # hoisted (1 + scale)
    gate_msa = m[2:3]

    h = _layernorm(x, ln1_ref[...]) * scale_msa + shift_msa
    qkv = jnp.dot(h.astype(jnp.bfloat16), wqkv_ref[...],
                  preferred_element_type=jnp.float32)        # [S, 3D] f32

    # fold 1/sqrt(Dh) into q (rotary is linear, so scaling commutes)
    q2 = qkv[:, :D] * (1.0 / math.sqrt(Dh))
    k2 = qkv[:, D:2 * D]
    v2 = qkv[:, 2 * D:]

    cos = cos_ref[...]                 # [S, Dh]
    sin = sin_ref[...]                 # [S, Dh], rotate-half sign pre-folded

    def swap_halves(t):
        return jnp.concatenate([t[:, half:], t[:, :half]], axis=-1)

    dn = (((1,), (1,)), ((), ()))      # qd,kd->qk (no explicit transpose)
    for hh in range(n_heads):          # static unrolled loop over heads
        sl = slice(hh * Dh, (hh + 1) * Dh)
        qh = q2[:, sl]
        kh = k2[:, sl]
        vh = v2[:, sl]
        # rotary position embedding on q and k only (f32)
        qh = qh * cos + swap_halves(qh) * sin
        kh = kh * cos + swap_halves(kh) * sin
        s = jax.lax.dot_general(qh.astype(jnp.bfloat16), kh.astype(jnp.bfloat16),
                                dn, preferred_element_type=jnp.float32)
        s = s - jnp.max(s, axis=-1, keepdims=True)
        p = jnp.exp(s)
        p = p * pl.reciprocal(jnp.sum(p, axis=-1, keepdims=True), approx=True)
        attn_acc[:, sl] = jnp.dot(p.astype(jnp.bfloat16), vh.astype(jnp.bfloat16),
                                  preferred_element_type=jnp.float32)

    proj = jnp.dot(attn_acc[...].astype(jnp.bfloat16), wo_ref[...],
                   preferred_element_type=jnp.float32)
    # bias_dropout_add_scale (inference): residual + gate * attn_out
    o_ref[0] = x + gate_msa * proj


def ddit_attn_pallas(x, mods_msa, cos, sin_signed, ln1, wqkv, wo, n_heads):
    B, S, D = x.shape
    Dh = D // n_heads
    est = (S * D * 4 + 3 * D * 4 + 2 * S * Dh * 4 + D * 4      # x, mods, cos/sin, ln
           + D * 3 * D * 2 + D * D * 2                          # bf16 weights
           + 2 * S * D * 4 + S * 3 * D * 4 + S * S * 4)         # out, scratch, live temps
    kernel = functools.partial(ddit_attn_kernel, n_heads=n_heads)
    return pl.pallas_call(
        kernel,
        out_shape=jax.ShapeDtypeStruct((B, S, D), jnp.float32),
        grid=(B,),
        in_specs=[
            pl.BlockSpec((1, S, D), lambda b: (b, 0, 0)),
            pl.BlockSpec((1, 3, D), lambda b: (b, 0, 0)),
            pl.BlockSpec((S, Dh), lambda b: (0, 0)),
            pl.BlockSpec((S, Dh), lambda b: (0, 0)),
            pl.BlockSpec((1, D), lambda b: (0, 0)),
            pl.BlockSpec((D, 3 * D), lambda b: (0, 0)),
            pl.BlockSpec((D, D), lambda b: (0, 0)),
        ],
        out_specs=pl.BlockSpec((1, S, D), lambda b: (b, 0, 0)),
        scratch_shapes=[pltpu.VMEM((S, D), jnp.float32)],
        compiler_params=_compiler_params(("parallel",), est),
    )(x, mods_msa, cos, sin_signed, ln1, wqkv, wo)


# ---------------------------------------------------------------------------
# Pallas kernel: DDiT block, MLP half (gridded over batch and sequence tiles)
# ---------------------------------------------------------------------------
def ddit_mlp_kernel(x_ref, mods_ref, ln2_ref, w1_ref, b1_ref, w2_ref, b2_ref,
                    o_ref):
    x = x_ref[0]                       # [tS, D] f32
    m = mods_ref[0]                    # [3, D]: shift_mlp, scale_mlp, gate_mlp
    shift_mlp = m[0:1]
    scale_mlp = 1.0 + m[1:2]
    gate_mlp = m[2:3]

    h = _layernorm(x, ln2_ref[...]) * scale_mlp + shift_mlp
    mid = jnp.dot(h.astype(jnp.bfloat16), w1_ref[...],
                  preferred_element_type=jnp.float32) + b1_ref[...]
    mid = _gelu_tanh(mid)
    mlp = jnp.dot(mid.astype(jnp.bfloat16), w2_ref[...],
                  preferred_element_type=jnp.float32) + b2_ref[...]
    o_ref[0] = x + gate_mlp * mlp


def ddit_mlp_pallas(x, mods_mlp, ln2, w1, b1, w2, b2, *, ts):
    B, S, D = x.shape
    H4 = w1.shape[1]
    est = (ts * D * 4 + 3 * D * 4 + D * 4
           + D * H4 * 2 + H4 * 4 + H4 * D * 2 + D * 4
           + ts * D * 4 + ts * H4 * 4)
    return pl.pallas_call(
        ddit_mlp_kernel,
        out_shape=jax.ShapeDtypeStruct((B, S, D), jnp.float32),
        grid=(B, S // ts),
        in_specs=[
            pl.BlockSpec((1, ts, D), lambda b, s: (b, s, 0)),
            pl.BlockSpec((1, 3, D), lambda b, s: (b, 0, 0)),
            pl.BlockSpec((1, D), lambda b, s: (0, 0)),
            pl.BlockSpec((D, H4), lambda b, s: (0, 0)),
            pl.BlockSpec((1, H4), lambda b, s: (0, 0)),
            pl.BlockSpec((H4, D), lambda b, s: (0, 0)),
            pl.BlockSpec((1, D), lambda b, s: (0, 0)),
        ],
        out_specs=pl.BlockSpec((1, ts, D), lambda b, s: (b, s, 0)),
        compiler_params=_compiler_params(("parallel", "parallel"), est),
    )(x, mods_mlp, ln2, w1, b1, w2, b2)


# ---------------------------------------------------------------------------
# Pallas kernel: DDitFinalLayer, tiled over the vocab dimension
# ---------------------------------------------------------------------------
def final_layer_kernel(x_ref, mods_ref, ln_ref, w_ref, b_ref, o_ref):
    x = x_ref[0]                       # [S, D]
    m = mods_ref[0]                    # [2, D]
    shift = m[0:1]
    scale = 1.0 + m[1:2]
    h = _layernorm(x, ln_ref[...]) * scale + shift
    o_ref[0] = jnp.dot(h.astype(jnp.bfloat16), w_ref[...],
                       preferred_element_type=jnp.float32) + b_ref[...]


def final_layer_pallas(x, mods_f, ln, w, b, *, tv):
    B, S, D = x.shape
    V = w.shape[1]
    est = (S * D * 4 + 2 * D * 4 + D * 4 + D * tv * 2 + tv * 4
           + 2 * S * tv * 4 + S * D * 4)
    return pl.pallas_call(
        final_layer_kernel,
        out_shape=jax.ShapeDtypeStruct((B, S, V), jnp.float32),
        grid=(B, V // tv),
        in_specs=[
            pl.BlockSpec((1, S, D), lambda b, j: (b, 0, 0)),
            pl.BlockSpec((1, 2, D), lambda b, j: (b, 0, 0)),
            pl.BlockSpec((1, D), lambda b, j: (0, 0)),
            pl.BlockSpec((D, tv), lambda b, j: (0, j)),
            pl.BlockSpec((1, tv), lambda b, j: (0, j)),
        ],
        out_specs=pl.BlockSpec((1, S, tv), lambda b, j: (b, 0, j)),
        compiler_params=_compiler_params(("parallel", "parallel"), est),
    )(x, mods_f, ln, w, b)


# ---------------------------------------------------------------------------
# plain-JAX glue (embedding gather, timestep embedding, rotary tables, adaLN)
# ---------------------------------------------------------------------------
def timestep_embedding(t, dim, max_period=10000):
    half = dim // 2
    freqs = jnp.exp(-math.log(max_period)
                    * jnp.arange(half, dtype=jnp.float32) / half)
    args = t[:, None].astype(jnp.float32) * freqs[None]
    return jnp.concatenate([jnp.cos(args), jnp.sin(args)], axis=-1)


def rotary_tables(seq_len, dh):
    inv_freq = 1.0 / (10000.0 ** (jnp.arange(0, dh, 2, dtype=jnp.float32) / dh))
    t = jnp.arange(seq_len, dtype=jnp.float32)
    freqs = t[:, None] * inv_freq[None, :]
    emb = jnp.concatenate([freqs, freqs], axis=-1)   # [S, dh]
    return jnp.cos(emb), jnp.sin(emb)


def dit_forward(params, indices, sigma, *, n_heads,
                mlp_seq_tile=None, vocab_tile=None):
    D = params['embed'].shape[1]
    B, S = indices.shape
    x = params['embed'][indices].astype(jnp.float32)               # vocab embed (gather)
    # TimestepEmbedder MLP, then c = silu(sigma_map(sigma))
    tf = timestep_embedding(sigma, params['t_w1'].shape[0])
    t_emb = jax.nn.silu(tf @ params['t_w1'] + params['t_b1']) @ params['t_w2'] + params['t_b2']
    c = jax.nn.silu(t_emb)                                          # [B, cond]

    Dh = D // n_heads
    half = Dh // 2
    cos, sin = rotary_tables(S, Dh)
    # fold the rotate-half negation into the sin table (kernel only swaps halves)
    sin_signed = jnp.concatenate([-sin[:, :half], sin[:, half:]], axis=-1)

    ts = mlp_seq_tile if mlp_seq_tile is not None else S
    tv = vocab_tile if vocab_tile is not None else params['final']['w'].shape[1]

    # TODO(synk): the reference code applies `rotary_cos_sin(q)` which returns a
    # (cos, sin) tuple and would crash; the intended semantics (apply rotary to
    # q and k, identity on v) are implemented here.
    for blk in params['blocks']:
        mods = (c @ blk['ada_w'] + blk['ada_b']).reshape(B, 6, D)
        x = ddit_attn_pallas(x, mods[:, 0:3], cos, sin_signed,
                             blk['ln1'], blk['wqkv'], blk['wo'], n_heads)
        x = ddit_mlp_pallas(x, mods[:, 3:6], blk['ln2'], blk['w1'], blk['b1'],
                            blk['w2'], blk['b2'], ts=ts)

    fin = params['final']
    mods_f = (c @ fin['ada_w'] + fin['ada_b']).reshape(B, 2, D)
    logits = final_layer_pallas(x, mods_f, fin['ln'], fin['w'], fin['b'], tv=tv)
    # TODO(synk): DIT.forward reads self.logZ_layer, which is never defined in
    # __init__; treated as absent -> logZ = None.
    return logits, None


# ---------------------------------------------------------------------------
# pure-JAX reference (for correctness check of the Pallas kernels)
# ---------------------------------------------------------------------------
def _mm_bf16(a, w):
    return jnp.einsum('...d,dk->...k', a.astype(jnp.bfloat16),
                      w.astype(jnp.bfloat16),
                      preferred_element_type=jnp.float32)


def _ref_block(x, mods, cos, sin, blk, n_heads):
    B, S, D = x.shape
    Dh = D // n_heads
    sh = lambda i: mods[:, i:i + 1, :]
    h = _layernorm(x, blk['ln1']) * (1.0 + sh(1)) + sh(0)
    qkv = _mm_bf16(h, blk['wqkv']).reshape(B, S, 3, n_heads, Dh)
    q, k, v = qkv[:, :, 0], qkv[:, :, 1], qkv[:, :, 2]
    cb, sb = cos[None, :, None, :], sin[None, :, None, :]
    rot = lambda t: jnp.concatenate([-t[..., Dh // 2:], t[..., :Dh // 2]], axis=-1)
    q = q * cb + rot(q) * sb
    k = k * cb + rot(k) * sb
    s = jnp.einsum('bqhd,bkhd->bhqk', q.astype(jnp.bfloat16), k.astype(jnp.bfloat16),
                   preferred_element_type=jnp.float32) / math.sqrt(Dh)
    p = jax.nn.softmax(s, axis=-1)
    a = jnp.einsum('bhqk,bkhd->bqhd', p.astype(jnp.bfloat16), v.astype(jnp.bfloat16),
                   preferred_element_type=jnp.float32).reshape(B, S, D)
    x1 = x + sh(2) * _mm_bf16(a, blk['wo'])
    h2 = _layernorm(x1, blk['ln2']) * (1.0 + sh(4)) + sh(3)
    mid = _gelu_tanh(_mm_bf16(h2, blk['w1']) + blk['b1'])
    return x1 + sh(5) * (_mm_bf16(mid, blk['w2']) + blk['b2'])


def dit_forward_ref(params, indices, sigma, *, n_heads):
    D = params['embed'].shape[1]
    B, S = indices.shape
    x = params['embed'][indices].astype(jnp.float32)
    tf = timestep_embedding(sigma, params['t_w1'].shape[0])
    t_emb = jax.nn.silu(tf @ params['t_w1'] + params['t_b1']) @ params['t_w2'] + params['t_b2']
    c = jax.nn.silu(t_emb)
    cos, sin = rotary_tables(S, D // n_heads)
    for blk in params['blocks']:
        mods = (c @ blk['ada_w'] + blk['ada_b']).reshape(B, 6, D)
        x = _ref_block(x, mods, cos, sin, blk, n_heads)
    fin = params['final']
    mods_f = (c @ fin['ada_w'] + fin['ada_b']).reshape(B, 2, D)
    h = _layernorm(x, fin['ln']) * (1.0 + mods_f[:, 1:2]) + mods_f[:, 0:1]
    return _mm_bf16(h, fin['w']) + fin['b'], None


# ---------------------------------------------------------------------------
# deterministic parameter init (shapes from the module's __init__)
# NOTE: torch zero-inits adaLN_modulation and the final linear; small random
# values are used instead so the synthetic forward exercises all paths.
# Matmul weights stored in bf16 (matches the torch autocast-bf16 region).
# ---------------------------------------------------------------------------
def init_params(key, *, vocab, D, cond, n_blocks, mlp_ratio, freq_dim):
    def nrm(k, shape, s=0.05, dtype=jnp.float32):
        return (s * jax.random.normal(k, shape)).astype(dtype)

    bf = jnp.bfloat16
    keys = jax.random.split(key, 3 + n_blocks)
    params = {'embed': nrm(keys[0], (vocab, D), 0.2)}
    kt = jax.random.split(keys[1], 4)
    params['t_w1'] = nrm(kt[0], (freq_dim, cond))
    params['t_b1'] = nrm(kt[1], (cond,), 0.01)
    params['t_w2'] = nrm(kt[2], (cond, cond))
    params['t_b2'] = nrm(kt[3], (cond,), 0.01)

    blocks = []
    for i in range(n_blocks):
        kb = jax.random.split(keys[2 + i], 10)
        blocks.append(dict(
            ln1=1.0 + nrm(kb[0], (1, D), 0.02),
            wqkv=nrm(kb[1], (D, 3 * D), dtype=bf),
            wo=nrm(kb[2], (D, D), dtype=bf),
            ln2=1.0 + nrm(kb[3], (1, D), 0.02),
            w1=nrm(kb[4], (D, mlp_ratio * D), dtype=bf),
            b1=nrm(kb[5], (1, mlp_ratio * D), 0.01),
            w2=nrm(kb[6], (mlp_ratio * D, D), dtype=bf),
            b2=nrm(kb[7], (1, D), 0.01),
            ada_w=nrm(kb[8], (cond, 6 * D), 0.02),
            ada_b=nrm(kb[9], (6 * D,), 0.02),
        ))
    params['blocks'] = blocks

    kf = jax.random.split(keys[2 + n_blocks], 5)
    params['final'] = dict(
        ln=1.0 + nrm(kf[0], (1, D), 0.02),
        w=nrm(kf[1], (D, vocab), dtype=bf),
        b=nrm(kf[2], (1, vocab), 0.01),
        ada_w=nrm(kf[3], (cond, 2 * D), 0.02),
        ada_b=nrm(kf[4], (2 * D,), 0.02),
    )
    return params


if __name__ == "__main__":
    # small but lane-aligned shapes (D, mlp hidden, V multiples of 128)
    B, S, D, H, COND, NBLK, V, MLP = 2, 16, 128, 4, 128, 2, 256, 4
    key = jax.random.PRNGKey(0)
    kp, ki, ks = jax.random.split(key, 3)
    params = init_params(kp, vocab=V, D=D, cond=COND,
                         n_blocks=NBLK, mlp_ratio=MLP, freq_dim=256)
    indices = jax.random.randint(ki, (B, S), 0, V)          # token ids
    sigma = jax.random.uniform(ks, (B,), minval=0.1, maxval=1.0)

    logits, logz = dit_forward(params, indices, sigma, n_heads=H,
                               mlp_seq_tile=8, vocab_tile=128)
    logits = jax.block_until_ready(logits)

    ref_logits, _ = dit_forward_ref(params, indices, sigma, n_heads=H)
    np.testing.assert_allclose(np.asarray(logits), np.asarray(ref_logits),
                               rtol=2e-2, atol=2e-2)
    print("KERNEL_OK")
</pallas_src>

<mosaic_0001>
module attributes {stable_mosaic.version = 11 : i64} {
  func.func @ddit_attn_kernel(%arg0: i32, %arg1: memref<1x16x128xf32, #tpu.memory_space<vmem>>, %arg2: memref<1x3x128xf32, #tpu.memory_space<vmem>>, %arg3: memref<16x32xf32, #tpu.memory_space<vmem>>, %arg4: memref<16x32xf32, #tpu.memory_space<vmem>>, %arg5: memref<1x128xf32, #tpu.memory_space<vmem>>, %arg6: memref<128x384xbf16, #tpu.memory_space<vmem>>, %arg7: memref<128x128xbf16, #tpu.memory_space<vmem>>, %arg8: memref<1x16x128xf32, #tpu.memory_space<vmem>>, %arg9: memref<16x128xf32, #tpu.memory_space<vmem>>) attributes {dimension_semantics = [#tpu.dimension_semantics<parallel>], iteration_bounds = array<i64: 2>, scalar_prefetch = 0 : i64, scratch_operands = 1 : i64, tpu.core_type = #tpu.core_type<tc>, window_params = [{transform_indices = @transform_0, window_bounds = array<i64: 1, 16, 128>}, {transform_indices = @transform_1, window_bounds = array<i64: 1, 3, 128>}, {pipeline_mode = #tpu.pipeline_mode<synchronous>, transform_indices = @transform_2, window_bounds = array<i64: 16, 32>}, {pipeline_mode = #tpu.pipeline_mode<synchronous>, transform_indices = @transform_3, window_bounds = array<i64: 16, 32>}, {pipeline_mode = #tpu.pipeline_mode<synchronous>, transform_indices = @transform_4, window_bounds = array<i64: 1, 128>}, {pipeline_mode = #tpu.pipeline_mode<synchronous>, transform_indices = @transform_5, window_bounds = array<i64: 128, 384>}, {pipeline_mode = #tpu.pipeline_mode<synchronous>, transform_indices = @transform_6, window_bounds = array<i64: 128, 128>}, {transform_indices = @transform_7, window_bounds = array<i64: 1, 16, 128>}]} {
    %c0 = arith.constant 0 : index
    %c0_0 = arith.constant 0 : index
    %c0_1 = arith.constant 0 : index
    %0 = vector.load %arg1[%c0, %c0_0, %c0_1] : memref<1x16x128xf32, #tpu.memory_space<vmem>>, vector<1x16x128xf32>
    %1 = vector.shape_cast %0 : vector<1x16x128xf32> to vector<16x128xf32>
    %c0_2 = arith.constant 0 : index
    %c0_3 = arith.constant 0 : index
    %c0_4 = arith.constant 0 : index
    %2 = vector.load %arg2[%c0_2, %c0_3, %c0_4] : memref<1x3x128xf32, #tpu.memory_space<vmem>>, vector<1x3x128xf32>
    %3 = vector.shape_cast %2 : vector<1x3x128xf32> to vector<3x128xf32>
    %4 = vector.extract_strided_slice %3 {offsets = [0, 0], sizes = [1, 128], strides = [1, 1]} : vector<3x128xf32> to vector<1x128xf32>
    %5 = vector.extract_strided_slice %3 {offsets = [1, 0], sizes = [1, 128], strides = [1, 1]} : vector<3x128xf32> to vector<1x128xf32>
    %cst = arith.constant 1.000000e+00 : f32
    %6 = vector.broadcast %cst : f32 to vector<1x128xf32>
    %7 = arith.addf %6, %5 : vector<1x128xf32>
    %8 = vector.extract_strided_slice %3 {offsets = [2, 0], sizes = [1, 128], strides = [1, 1]} : vector<3x128xf32> to vector<1x128xf32>
    %c0_5 = arith.constant 0 : index
    %c0_6 = arith.constant 0 : index
    %9 = vector.load %arg5[%c0_5, %c0_6] : memref<1x128xf32, #tpu.memory_space<vmem>>, vector<1x128xf32>
    %cst_7 = arith.constant dense<0.000000e+00> : vector<16xf32>
    %10 = vector.multi_reduction <add>, %1, %cst_7 [1] : vector<16x128xf32> to vector<16xf32>
    %11 = vector.shape_cast %10 : vector<16xf32> to vector<16x1xf32>
    %cst_8 = arith.constant 1.280000e+02 : f32
    %12 = vector.broadcast %cst_8 : f32 to vector<16x1xf32>
    %13 = arith.divf %11, %12 : vector<16x1xf32>
    %14 = vector.broadcast %13 : vector<16x1xf32> to vector<16x128xf32>
    %15 = arith.subf %1, %14 : vector<16x128xf32>
    %16 = arith.mulf %15, %15 : vector<16x128xf32>
    %cst_9 = arith.constant dense<0.000000e+00> : vector<16xf32>
    %17 = vector.multi_reduction <add>, %16, %cst_9 [1] : vector<16x128xf32> to vector<16xf32>
    %18 = vector.shape_cast %17 : vector<16xf32> to vector<16x1xf32>
    %cst_10 = arith.constant 1.280000e+02 : f32
    %19 = vector.broadcast %cst_10 : f32 to vector<16x1xf32>
    %20 = arith.divf %18, %19 : vector<16x1xf32>
    %cst_11 = arith.constant 9.99999974E-6 : f32
    %21 = vector.broadcast %cst_11 : f32 to vector<16x1xf32>
    %22 = arith.addf %20, %21 : vector<16x1xf32>
    %23 = math.rsqrt %22 : vector<16x1xf32>
    %24 = vector.broadcast %23 : vector<16x1xf32> to vector<16x128xf32>
    %25 = arith.mulf %15, %24 : vector<16x128xf32>
    %26 = vector.broadcast %9 : vector<1x128xf32> to vector<16x128xf32>
    %27 = arith.mulf %25, %26 : vector<16x128xf32>
    %28 = vector.broadcast %7 : vector<1x128xf32> to vector<16x128xf32>
    %29 = arith.mulf %27, %28 : vector<16x128xf32>
    %30 = vector.broadcast %4 : vector<1x128xf32> to vector<16x128xf32>
    %31 = arith.addf %29, %30 : vector<16x128xf32>
    %32 = arith.truncf %31 : vector<16x128xf32> to vector<16x128xbf16>
    %c0_12 = arith.constant 0 : index
    %c0_13 = arith.constant 0 : index
    %33 = vector.load %arg6[%c0_12, %c0_13] : memref<128x384xbf16, #tpu.memory_space<vmem>>, vector<128x384xbf16>
    %cst_14 = arith.constant dense<0.000000e+00> : vector<16x384xf32>
    %34 = tpu.matmul %32, %33, %cst_14 {dimension_numbers = #tpu.dot_dimension_numbers<[1], [0], [0], [1], [0, 0, 1, 1], [], []>} : vector<16x128xbf16>, vector<128x384xbf16>, vector<16x384xf32> -> vector<16x384xf32>
    %35 = vector.extract_strided_slice %34 {offsets = [0, 0], sizes = [16, 128], strides = [1, 1]} : vector<16x384xf32> to vector<16x128xf32>
    %cst_15 = arith.constant 0.176776692 : f32
    %36 = vector.broadcast %cst_15 : f32 to vector<16x128xf32>
    %37 = arith.mulf %35, %36 : vector<16x128xf32>
    %38 = vector.extract_strided_slice %34 {offsets = [0, 128], sizes = [16, 128], strides = [1, 1]} : vector<16x384xf32> to vector<16x128xf32>
    %39 = vector.extract_strided_slice %34 {offsets = [0, 256], sizes = [16, 128], strides = [1, 1]} : vector<16x384xf32> to vector<16x128xf32>
    %c0_16 = arith.constant 0 : index
    %c0_17 = arith.constant 0 : index
    %40 = vector.load %arg3[%c0_16, %c0_17] : memref<16x32xf32, #tpu.memory_space<vmem>>, vector<16x32xf32>
    %c0_18 = arith.constant 0 : index
    %c0_19 = arith.constant 0 : index
    %41 = vector.load %arg4[%c0_18, %c0_19] : memref<16x32xf32, #tpu.memory_space<vmem>>, vector<16x32xf32>
    %42 = vector.extract_strided_slice %37 {offsets = [0, 0], sizes = [16, 32], strides = [1, 1]} : vector<16x128xf32> to vector<16x32xf32>
    %43 = vector.extract_strided_slice %38 {offsets = [0, 0], sizes = [16, 32], strides = [1, 1]} : vector<16x128xf32> to vector<16x32xf32>
    %44 = vector.extract_strided_slice %39 {offsets = [0, 0], sizes = [16, 32], strides = [1, 1]} : vector<16x128xf32> to vector<16x32xf32>
    %45 = arith.mulf %42, %40 : vector<16x32xf32>
    %46 = vector.extract_strided_slice %42 {offsets = [0, 16], sizes = [16, 16], strides = [1, 1]} : vector<16x32xf32> to vector<16x16xf32>
    %47 = vector.extract_strided_slice %42 {offsets = [0, 0], sizes = [16, 16], strides = [1, 1]} : vector<16x32xf32> to vector<16x16xf32>
    %48 = tpu.concatenate %46, %47 in 1 : vector<16x16xf32>, vector<16x16xf32> -> vector<16x32xf32>
    %49 = arith.mulf %48, %41 : vector<16x32xf32>
    %50 = arith.addf %45, %49 : vector<16x32xf32>
    %51 = arith.mulf %43, %40 : vector<16x32xf32>
    %52 = vector.extract_strided_slice %43 {offsets = [0, 16], sizes = [16, 16], strides = [1, 1]} : vector<16x32xf32> to vector<16x16xf32>
    %53 = vector.extract_strided_slice %43 {offsets = [0, 0], sizes = [16, 16], strides = [1, 1]} : vector<16x32xf32> to vector<16x16xf32>
    %54 = tpu.concatenate %52, %53 in 1 : vector<16x16xf32>, vector<16x16xf32> -> vector<16x32xf32>
    %55 = arith.mulf %54, %41 : vector<16x32xf32>
    %56 = arith.addf %51, %55 : vector<16x32xf32>
    %57 = arith.truncf %50 : vector<16x32xf32> to vector<16x32xbf16>
    %58 = arith.truncf %56 : vector<16x32xf32> to vector<16x32xbf16>
    %cst_20 = arith.constant dense<0.000000e+00> : vector<16x16xf32>
    %59 = tpu.matmul %57, %58, %cst_20 {dimension_numbers = #tpu.dot_dimension_numbers<[1], [1], [0], [0], [0, 0, 1, 0], [], []>} : vector<16x32xbf16>, vector<16x32xbf16>, vector<16x16xf32> -> vector<16x16xf32>
    %cst_21 = arith.constant dense<0xFF800000> : vector<16xf32>
    %60 = vector.multi_reduction <maximumf>, %59, %cst_21 [1] : vector<16x16xf32> to vector<16xf32>
    %61 = vector.shape_cast %60 : vector<16xf32> to vector<16x1xf32>
    %62 = vector.broadcast %61 : vector<16x1xf32> to vector<16x16xf32>
    %63 = arith.subf %59, %62 : vector<16x16xf32>
    %64 = math.exp %63 : vector<16x16xf32>
    %cst_22 = arith.constant dense<0.000000e+00> : vector<16xf32>
    %65 = vector.multi_reduction <add>, %64, %cst_22 [1] : vector<16x16xf32> to vector<16xf32>
    %66 = vector.shape_cast %65 : vector<16xf32> to vector<16x1xf32>
    %67 = tpu.reciprocal %66 {approx = true} : vector<16x1xf32> -> vector<16x1xf32>
    %68 = vector.broadcast %67 : vector<16x1xf32> to vector<16x16xf32>
    %69 = arith.mulf %64, %68 : vector<16x16xf32>
    %70 = arith.truncf %69 : vector<16x16xf32> to vector<16x16xbf16>
    %71 = arith.truncf %44 : vector<16x32xf32> to vector<16x32xbf16>
    %cst_23 = arith.constant dense<0.000000e+00> : vector<16x32xf32>
    %72 = tpu.matmul %70, %71, %cst_23 {dimension_numbers = #tpu.dot_dimension_numbers<[1], [0], [0], [1], [0, 0, 1, 1], [], []>} : vector<16x16xbf16>, vector<16x32xbf16>, vector<16x32xf32> -> vector<16x32xf32>
    %c0_24 = arith.constant 0 : index
    %c0_25 = arith.constant 0 : index
    %73 = vector.load %arg9[%c0_24, %c0_25] : memref<16x128xf32, #tpu.memory_space<vmem>>, vector<16x32xf32>
    tpu.vector_store %arg9[%c0_24, %c0_25], %72 {strides = array<i32>} : memref<16x128xf32, #tpu.memory_space<vmem>>, vector<16x32xf32>,
    %74 = vector.extract_strided_slice %37 {offsets = [0, 32], sizes = [16, 32], strides = [1, 1]} : vector<16x128xf32> to vector<16x32xf32>
    %75 = vector.extract_strided_slice %38 {offsets = [0, 32], sizes = [16, 32], strides = [1, 1]} : vector<16x128xf32> to vector<16x32xf32>
    %76 = vector.extract_strided_slice %39 {offsets = [0, 32], sizes = [16, 32], strides = [1, 1]} : vector<16x128xf32> to vector<16x32xf32>
    %77 = arith.mulf %74, %40 : vector<16x32xf32>
    %78 = vector.extract_strided_slice %74 {offsets = [0, 16], sizes = [16, 16], strides = [1, 1]} : vector<16x32xf32> to vector<16x16xf32>
    %79 = vector.extract_strided_slice %74 {offsets = [0, 0], sizes = [16, 16], strides = [1, 1]} : vector<16x32xf32> to vector<16x16xf32>
    %80 = tpu.concatenate %78, %79 in 1 : vector<16x16xf32>, vector<16x16xf32> -> vector<16x32xf32>
    %81 = arith.mulf %80, %41 : vector<16x32xf32>
    %82 = arith.addf %77, %81 : vector<16x32xf32>
    %83 = arith.mulf %75, %40 : vector<16x32xf32>
    %84 = vector.extract_strided_slice %75 {offsets = [0, 16], sizes = [16, 16], strides = [1, 1]} : vector<16x32xf32> to vector<16x16xf32>
    %85 = vector.extract_strided_slice %75 {offsets = [0, 0], sizes = [16, 16], strides = [1, 1]} : vector<16x32xf32> to vector<16x16xf32>
    %86 = tpu.concatenate %84, %85 in 1 : vector<16x16xf32>, vector<16x16xf32> -> vector<16x32xf32>
    %87 = arith.mulf %86, %41 : vector<16x32xf32>
    %88 = arith.addf %83, %87 : vector<16x32xf32>
    %89 = arith.truncf %82 : vector<16x32xf32> to vector<16x32xbf16>
    %90 = arith.truncf %88 : vector<16x32xf32> to vector<16x32xbf16>
    %cst_26 = arith.constant dense<0.000000e+00> : vector<16x16xf32>
    %91 = tpu.matmul %89, %90, %cst_26 {dimension_numbers = #tpu.dot_dimension_numbers<[1], [1], [0], [0], [0, 0, 1, 0], [], []>} : vector<16x32xbf16>, vector<16x32xbf16>, vector<16x16xf32> -> vector<16x16xf32>
    %cst_27 = arith.constant dense<0xFF800000> : vector<16xf32>
    %92 = vector.multi_reduction <maximumf>, %91, %cst_27 [1] : vector<16x16xf32> to vector<16xf32>
    %93 = vector.shape_cast %92 : vector<16xf32> to vector<16x1xf32>
    %94 = vector.broadcast %93 : vector<16x1xf32> to vector<16x16xf32>
    %95 = arith.subf %91, %94 : vector<16x16xf32>
    %96 = math.exp %95 : vector<16x16xf32>
    %cst_28 = arith.constant dense<0.000000e+00> : vector<16xf32>
    %97 = vector.multi_reduction <add>, %96, %cst_28 [1] : vector<16x16xf32> to vector<16xf32>
    %98 = vector.shape_cast %97 : vector<16xf32> to vector<16x1xf32>
    %99 = tpu.reciprocal %98 {approx = true} : vector<16x1xf32> -> vector<16x1xf32>
    %100 = vector.broadcast %99 : vector<16x1xf32> to vector<16x16xf32>
    %101 = arith.mulf %96, %100 : vector<16x16xf32>
    %102 = arith.truncf %101 : vector<16x16xf32> to vector<16x16xbf16>
    %103 = arith.truncf %76 : vector<16x32xf32> to vector<16x32xbf16>
    %cst_29 = arith.constant dense<0.000000e+00> : vector<16x32xf32>
    %104 = tpu.matmul %102, %103, %cst_29 {dimension_numbers = #tpu.dot_dimension_numbers<[1], [0], [0], [1], [0, 0, 1, 1], [], []>} : vector<16x16xbf16>, vector<16x32xbf16>, vector<16x32xf32> -> vector<16x32xf32>
    %c0_30 = arith.constant 0 : index
    %c32 = arith.constant 32 : index
    %105 = vector.load %arg9[%c0_30, %c32] : memref<16x128xf32, #tpu.memory_space<vmem>>, vector<16x32xf32>
    tpu.vector_store %arg9[%c0_30, %c32], %104 {strides = array<i32>} : memref<16x128xf32, #tpu.memory_space<vmem>>, vector<16x32xf32>,
    %106 = vector.extract_strided_slice %37 {offsets = [0, 64], sizes = [16, 32], strides = [1, 1]} : vector<16x128xf32> to vector<16x32xf32>
    %107 = vector.extract_strided_slice %38 {offsets = [0, 64], sizes = [16, 32], strides = [1, 1]} : vector<16x128xf32> to vector<16x32xf32>
    %108 = vector.extract_strided_slice %39 {offsets = [0, 64], sizes = [16, 32], strides = [1, 1]} : vector<16x128xf32> to vector<16x32xf32>
    %109 = arith.mulf %106, %40 : vector<16x32xf32>
    %110 = vector.extract_strided_slice %106 {offsets = [0, 16], sizes = [16, 16], strides = [1, 1]} : vector<16x32xf32> to vector<16x16xf32>
    %111 = vector.extract_strided_slice %106 {offsets = [0, 0], sizes = [16, 16], strides = [1, 1]} : vector<16x32xf32> to vector<16x16xf32>
    %112 = tpu.concatenate %110, %111 in 1 : vector<16x16xf32>, vector<16x16xf32> -> vector<16x32xf32>
    %113 = arith.mulf %112, %41 : vector<16x32xf32>
    %114 = arith.addf %109, %113 : vector<16x32xf32>
    %115 = arith.mulf %107, %40 : vector<16x32xf32>
    %116 = vector.extract_strided_slice %107 {offsets = [0, 16], sizes = [16, 16], strides = [1, 1]} : vector<16x32xf32> to vector<16x16xf32>
    %117 = vector.extract_strided_slice %107 {offsets = [0, 0], sizes = [16, 16], strides = [1, 1]} : vector<16x32xf32> to vector<16x16xf32>
    %118 = tpu.concatenate %116, %117 in 1 : vector<16x16xf32>, vector<16x16xf32> -> vector<16x32xf32>
    %119 = arith.mulf %118, %41 : vector<16x32xf32>
    %120 = arith.addf %115, %119 : vector<16x32xf32>
    %121 = arith.truncf %114 : vector<16x32xf32> to vector<16x32xbf16>
    %122 = arith.truncf %120 : vector<16x32xf32> to vector<16x32xbf16>
    %cst_31 = arith.constant dense<0.000000e+00> : vector<16x16xf32>
    %123 = tpu.matmul %121, %122, %cst_31 {dimension_numbers = #tpu.dot_dimension_numbers<[1], [1], [0], [0], [0, 0, 1, 0], [], []>} : vector<16x32xbf16>, vector<16x32xbf16>, vector<16x16xf32> -> vector<16x16xf32>
    %cst_32 = arith.constant dense<0xFF800000> : vector<16xf32>
    %124 = vector.multi_reduction <maximumf>, %123, %cst_32 [1] : vector<16x16xf32> to vector<16xf32>
    %125 = vector.shape_cast %124 : vector<16xf32> to vector<16x1xf32>
    %126 = vector.broadcast %125 : vector<16x1xf32> to vector<16x16xf32>
    %127 = arith.subf %123, %126 : vector<16x16xf32>
    %128 = math.exp %127 : vector<16x16xf32>
    %cst_33 = arith.constant dense<0.000000e+00> : vector<16xf32>
    %129 = vector.multi_reduction <add>, %128, %cst_33 [1] : vector<16x16xf32> to vector<16xf32>
    %130 = vector.shape_cast %129 : vector<16xf32> to vector<16x1xf32>
    %131 = tpu.reciprocal %130 {approx = true} : vector<16x1xf32> -> vector<16x1xf32>
    %132 = vector.broadcast %131 : vector<16x1xf32> to vector<16x16xf32>
    %133 = arith.mulf %128, %132 : vector<16x16xf32>
    %134 = arith.truncf %133 : vector<16x16xf32> to vector<16x16xbf16>
    %135 = arith.truncf %108 : vector<16x32xf32> to vector<16x32xbf16>
    %cst_34 = arith.constant dense<0.000000e+00> : vector<16x32xf32>
    %136 = tpu.matmul %134, %135, %cst_34 {dimension_numbers = #tpu.dot_dimension_numbers<[1], [0], [0], [1], [0, 0, 1, 1], [], []>} : vector<16x16xbf16>, vector<16x32xbf16>, vector<16x32xf32> -> vector<16x32xf32>
    %c0_35 = arith.constant 0 : index
    %c64 = arith.constant 64 : index
    %137 = vector.load %arg9[%c0_35, %c64] : memref<16x128xf32, #tpu.memory_space<vmem>>, vector<16x32xf32>
    tpu.vector_store %arg9[%c0_35, %c64], %136 {strides = array<i32>} : memref<16x128xf32, #tpu.memory_space<vmem>>, vector<16x32xf32>,
    %138 = vector.extract_strided_slice %37 {offsets = [0, 96], sizes = [16, 32], strides = [1, 1]} : vector<16x128xf32> to vector<16x32xf32>
    %139 = vector.extract_strided_slice %38 {offsets = [0, 96], sizes = [16, 32], strides = [1, 1]} : vector<16x128xf32> to vector<16x32xf32>
    %140 = vector.extract_strided_slice %39 {offsets = [0, 96], sizes = [16, 32], strides = [1, 1]} : vector<16x128xf32> to vector<16x32xf32>
    %141 = arith.mulf %138, %40 : vector<16x32xf32>
    %142 = vector.extract_strided_slice %138 {offsets = [0, 16], sizes = [16, 16], strides = [1, 1]} : vector<16x32xf32> to vector<16x16xf32>
    %143 = vector.extract_strided_slice %138 {offsets = [0, 0], sizes = [16, 16], strides = [1, 1]} : vector<16x32xf32> to vector<16x16xf32>
    %144 = tpu.concatenate %142, %143 in 1 : vector<16x16xf32>, vector<16x16xf32> -> vector<16x32xf32>
    %145 = arith.mulf %144, %41 : vector<16x32xf32>
    %146 = arith.addf %141, %145 : vector<16x32xf32>
    %147 = arith.mulf %139, %40 : vector<16x32xf32>
    %148 = vector.extract_strided_slice %139 {offsets = [0, 16], sizes = [16, 16], strides = [1, 1]} : vector<16x32xf32> to vector<16x16xf32>
    %149 = vector.extract_strided_slice %139 {offsets = [0, 0], sizes = [16, 16], strides = [1, 1]} : vector<16x32xf32> to vector<16x16xf32>
    %150 = tpu.concatenate %148, %149 in 1 : vector<16x16xf32>, vector<16x16xf32> -> vector<16x32xf32>
    %151 = arith.mulf %150, %41 : vector<16x32xf32>
    %152 = arith.addf %147, %151 : vector<16x32xf32>
    %153 = arith.truncf %146 : vector<16x32xf32> to vector<16x32xbf16>
    %154 = arith.truncf %152 : vector<16x32xf32> to vector<16x32xbf16>
    %cst_36 = arith.constant dense<0.000000e+00> : vector<16x16xf32>
    %155 = tpu.matmul %153, %154, %cst_36 {dimension_numbers = #tpu.dot_dimension_numbers<[1], [1], [0], [0], [0, 0, 1, 0], [], []>} : vector<16x32xbf16>, vector<16x32xbf16>, vector<16x16xf32> -> vector<16x16xf32>
    %cst_37 = arith.constant dense<0xFF800000> : vector<16xf32>
    %156 = vector.multi_reduction <maximumf>, %155, %cst_37 [1] : vector<16x16xf32> to vector<16xf32>
    %157 = vector.shape_cast %156 : vector<16xf32> to vector<16x1xf32>
    %158 = vector.broadcast %157 : vector<16x1xf32> to vector<16x16xf32>
    %159 = arith.subf %155, %158 : vector<16x16xf32>
    %160 = math.exp %159 : vector<16x16xf32>
    %cst_38 = arith.constant dense<0.000000e+00> : vector<16xf32>
    %161 = vector.multi_reduction <add>, %160, %cst_38 [1] : vector<16x16xf32> to vector<16xf32>
    %162 = vector.shape_cast %161 : vector<16xf32> to vector<16x1xf32>
    %163 = tpu.reciprocal %162 {approx = true} : vector<16x1xf32> -> vector<16x1xf32>
    %164 = vector.broadcast %163 : vector<16x1xf32> to vector<16x16xf32>
    %165 = arith.mulf %160, %164 : vector<16x16xf32>
    %166 = arith.truncf %165 : vector<16x16xf32> to vector<16x16xbf16>
    %167 = arith.truncf %140 : vector<16x32xf32> to vector<16x32xbf16>
    %cst_39 = arith.constant dense<0.000000e+00> : vector<16x32xf32>
    %168 = tpu.matmul %166, %167, %cst_39 {dimension_numbers = #tpu.dot_dimension_numbers<[1], [0], [0], [1], [0, 0, 1, 1], [], []>} : vector<16x16xbf16>, vector<16x32xbf16>, vector<16x32xf32> -> vector<16x32xf32>
    %c0_40 = arith.constant 0 : index
    %c96 = arith.constant 96 : index
    %169 = vector.load %arg9[%c0_40, %c96] : memref<16x128xf32, #tpu.memory_space<vmem>>, vector<16x32xf32>
    tpu.vector_store %arg9[%c0_40, %c96], %168 {strides = array<i32>} : memref<16x128xf32, #tpu.memory_space<vmem>>, vector<16x32xf32>,
    %c0_41 = arith.constant 0 : index
    %c0_42 = arith.constant 0 : index
    %170 = vector.load %arg9[%c0_41, %c0_42] : memref<16x128xf32, #tpu.memory_space<vmem>>, vector<16x128xf32>
    %171 = arith.truncf %170 : vector<16x128xf32> to vector<16x128xbf16>
    %c0_43 = arith.constant 0 : index
    %c0_44 = arith.constant 0 : index
    %172 = vector.load %arg7[%c0_43, %c0_44] : memref<128x128xbf16, #tpu.memory_space<vmem>>, vector<128x128xbf16>
    %cst_45 = arith.constant dense<0.000000e+00> : vector<16x128xf32>
    %173 = tpu.matmul %171, %172, %cst_45 {dimension_numbers = #tpu.dot_dimension_numbers<[1], [0], [0], [1], [0, 0, 1, 1], [], []>} : vector<16x128xbf16>, vector<128x128xbf16>, vector<16x128xf32> -> vector<16x128xf32>
    %174 = vector.broadcast %8 : vector<1x128xf32> to vector<16x128xf32>
    %175 = arith.mulf %174, %173 : vector<16x128xf32>
    %176 = arith.addf %1, %175 : vector<16x128xf32>
    %c0_46 = arith.constant 0 : index
    %c0_47 = arith.constant 0 : index
    %c0_48 = arith.constant 0 : index
    %177 = vector.load %arg8[%c0_46, %c0_47, %c0_48] : memref<1x16x128xf32, #tpu.memory_space<vmem>>, vector<1x16x128xf32>
    %178 = vector.shape_cast %177 : vector<1x16x128xf32> to vector<16x128xf32>
    %179 = vector.shape_cast %176 : vector<16x128xf32> to vector<1x16x128xf32>
    tpu.vector_store %arg8[%c0_46, %c0_47, %c0_48], %179 {strides = array<i32>} : memref<1x16x128xf32, #tpu.memory_space<vmem>>, vector<1x16x128xf32>,
    return
  }
  func.func @transform_0(%arg0: i32) -> (i32, i32, i32) {
    %c0_i32 = arith.constant 0 : i32
    %c0_i32_0 = arith.constant 0 : i32
    %c0_i32_1 = arith.constant 0 : i32
    return %arg0, %c0_i32, %c0_i32_0 : i32, i32, i32
  }
  func.func @transform_1(%arg0: i32) -> (i32, i32, i32) {
    %c0_i32 = arith.constant 0 : i32
    %c0_i32_0 = arith.constant 0 : i32
    %c0_i32_1 = arith.constant 0 : i32
    return %arg0, %c0_i32, %c0_i32_0 : i32, i32, i32
  }
  func.func @transform_2(%arg0: i32) -> (i32, i32) {
    %c0_i32 = arith.constant 0 : i32
    %c0_i32_0 = arith.constant 0 : i32
    %c0_i32_1 = arith.constant 0 : i32
    return %c0_i32, %c0_i32_0 : i32, i32
  }
  func.func @transform_3(%arg0: i32) -> (i32, i32) {
    %c0_i32 = arith.constant 0 : i32
    %c0_i32_0 = arith.constant 0 : i32
    %c0_i32_1 = arith.constant 0 : i32
    return %c0_i32, %c0_i32_0 : i32, i32
  }
  func.func @transform_4(%arg0: i32) -> (i32, i32) {
    %c0_i32 = arith.constant 0 : i32
    %c0_i32_0 = arith.constant 0 : i32
    %c0_i32_1 = arith.constant 0 : i32
    return %c0_i32, %c0_i32_0 : i32, i32
  }
  func.func @transform_5(%arg0: i32) -> (i32, i32) {
    %c0_i32 = arith.constant 0 : i32
    %c0_i32_0 = arith.constant 0 : i32
    %c0_i32_1 = arith.constant 0 : i32
    return %c0_i32, %c0_i32_0 : i32, i32
  }
  func.func @transform_6(%arg0: i32) -> (i32, i32) {
    %c0_i32 = arith.constant 0 : i32
    %c0_i32_0 = arith.constant 0 : i32
    %c0_i32_1 = arith.constant 0 : i32
    return %c0_i32, %c0_i32_0 : i32, i32
  }
  func.func @transform_7(%arg0: i32) -> (i32, i32, i32) {
    %c0_i32 = arith.constant 0 : i32
    %c0_i32_0 = arith.constant 0 : i32
    %c0_i32_1 = arith.constant 0 : i32
    return %arg0, %c0_i32, %c0_i32_0 : i32, i32, i32
  }
}

</mosaic_0001>

<llo_original>
// kernel: tpu_custom_call.1
$region0: #{tpu_custom_call.1}
  #allocation0 [shape = 'u32[]', space=smem, size = 0x4, offset = 0x4, fixed_abs, tag = 'smem constant byte address 0x4 - core index']
  #allocation1 [shape = 'u32[72,128]{1,0:T(1,128)}', space=vmem, size = 0x9000, scoped, tag = 'internal scratch']
  #allocation2 [shape = 'f32[16,128]{1,0:T(8,128)}', space=vmem, size = 0x2000, scoped, tag = 'scratch operand']
  %s0 = inlined_call_operand.hbm [shape: f32[2,16,128], index: 0, kind: input, shape index: {}]
  %s1 = inlined_call_operand.vmem [shape: f32[2,3,128], index: 1, kind: input, shape index: {}]
  %s2 = inlined_call_operand.hbm [shape: f32[16,32], index: 2, kind: input, shape index: {}]
  %s3 = inlined_call_operand.vmem [shape: f32[16,32], index: 3, kind: input, shape index: {}]
  %s4 = inlined_call_operand.vmem [shape: f32[1,128], index: 4, kind: input, shape index: {}]
  %s5 = inlined_call_operand.hbm [shape: bf16[128,384], index: 5, kind: input, shape index: {}]
  %s6 = inlined_call_operand.hbm [shape: bf16[128,128], index: 6, kind: input, shape index: {}]
  %s7 = inlined_call_operand.hbm [shape: f32[2,16,128], index: 7, kind: output, shape index: {}]
  %s8 = sld [smem:[#allocation0]]
  $region77: #{tpu_custom_call.1} parent=0
    _
  %s10 = ssub.s32 1, %s8
  %s11 = scalar_select 0, %s10, %s8
  $region1: #{tpu_custom_call.1} parent=0
    #allocation3 [shape = 'u8[16384]{0}', space=vmem, size = 0x4000, scoped, tag = 'input window, operand 0']
    #allocation4 [shape = 's32[2]{0}', space=sflag, size = 0x8, scoped, tag = 'scoped memory for tpu_custom_call.1']
    #allocation5 [shape = 's32[2]{0}', space=sflag, size = 0x8, scoped, tag = 'scoped memory for tpu_custom_call.1']
    #allocation6 [shape = 'u8[8192]{0}', space=vmem, size = 0x2000, scoped, tag = 'input window, operand 2, single buffered']
    #allocation7 [shape = 's32[1]{0}', space=sflag, size = 0x4, scoped, tag = 'scoped memory for tpu_custom_call.1']
    #allocation8 [shape = 'u8[98304]{0}', space=vmem, size = 0x18000, scoped, tag = 'input window, operand 5, single buffered']
    #allocation9 [shape = 'u8[32768]{0}', space=vmem, size = 0x8000, scoped, tag = 'input window, operand 6, single buffered']
    #allocation10 [shape = 's32[1]{0}', space=sflag, size = 0x4, scoped, tag = 'scoped memory for tpu_custom_call.1']
    #allocation11 [shape = 'u8[16384]{0}', space=vmem, size = 0x4000, scoped, tag = 'output window, operand 0']
    %12 = vsyncpa [#allocation4], 0
    %s13 = scalar_lea.sflag [#allocation4], 1
    %14 = vsyncpa %s13, 0
    %15 = vsyncpa [#allocation7], 0
    %16 = vsyncpa [#allocation10], 0
    %17 = vsyncpa [#allocation5], 0
    %s18 = scalar_lea.sflag [#allocation5], 1
    %19 = vsyncpa %s18, 0
    loop: start=0, step=1, limit=4
    $region2: #{tpu_custom_call.1} parent=1 // loop_pre_header
      _
    $region3: #{tpu_custom_call.1} parent=1 // loop_header
      %s21 = sphi 0, %s25
      %p22 = scmp.ge.s32.totalorder %s21, 4
      %s31 = sphi 0, %s33
      %s34 = sphi 0, %s31
      %s35 = sphi 0, %s34
      %s51 = sphi 0, %s35
      %s57 = sphi 0, %s59
      %s60 = sphi 0, %s57
      %s61 = sphi 0, %s60
      %s77 = sphi 0, %s61
      %s81 = sphi 0, %s81
      %s83 = sphi 0, %s81
      %s84 = sphi 0, %s83
      %s98 = sphi 0, %s84
      %s102 = sphi 0, %s102
      %s104 = sphi 0, %s102
      %s105 = sphi 0, %s104
      %s119 = sphi 0, %s105
      %s123 = sphi 0, %s123
      %s125 = sphi 0, %s123
      %s126 = sphi 0, %s125
      %s140 = sphi 0, %s126
      %s144 = sphi 0, %s144
      %s146 = sphi 0, %s144
      %s147 = sphi 0, %s146
      %s161 = sphi 0, %s147
      %s165 = sphi 0, %s165
      %s167 = sphi 0, %s165
      %s168 = sphi 0, %s167
      %s182 = sphi 0, %s168
      %s188 = sphi 0, %s190
      %s191 = sphi 0, %s188
      %s192 = sphi 0, %s191
      %s208 = sphi 0, %s192
    $region4: #{tpu_custom_call.1} parent=1 // loop_header_branch
      %24 = sbr.rel (%p22) target = $region8
    $region5: #{tpu_custom_call.1} parent=1 // loop_body
      %s26 = ssub.s32 %s21, 1
      %s27 = ssub.s32 %s21, 2
      %s28 = sadd.s32 %s21, 1
      %s29 = ssub.s32 %s21, %s28
      %p30 = scmp.eq.s32.totalorder %s29, 0
      %s32 = sadd.s32 %s31, 1
      %s33 = scalar_select %p30, %s31, %s32
      %p36 = pneg %p30
      %p37 = scmp.eq.s32.totalorder %s21, 1
      %p38 = por %p36, %p37
      %p39 = scmp.ne.s32.totalorder %s31, %s34
      %p40 = scmp.eq.s32.totalorder %s21, 0
      %p41 = por %p39, %p40
      %p42 = scmp.ne.s32.totalorder %s31, %s34
      %p43 = scmp.eq.s32.totalorder %s26, 1
      %p44 = por %p42, %p43
      %p45 = scmp.ne.s32.totalorder %s34, %s35
      %p46 = scmp.eq.s32.totalorder %s26, 0
      %p47 = por %p45, %p46
      %p48 = scmp.ne.s32.totalorder %s34, %s35
      %p49 = scmp.eq.s32.totalorder %s27, 1
      %p50 = por %p48, %p49
      %p52 = scmp.ne.s32.totalorder %s35, %s51
      %p53 = scmp.eq.s32.totalorder %s27, 0
      %p54 = por %p52, %p53
      %s55 = ssub.s32 %s21, %s28
      %p56 = scmp.eq.s32.totalorder %s55, 0
      %s58 = sadd.s32 %s57, 1
      %s59 = scalar_select %p56, %s57, %s58
      %p62 = pneg %p56
      %p63 = scmp.eq.s32.totalorder %s21, 1
      %p64 = por %p62, %p63
      %p65 = scmp.ne.s32.totalorder %s57, %s60
      %p66 = scmp.eq.s32.totalorder %s21, 0
      %p67 = por %p65, %p66
      %p68 = scmp.ne.s32.totalorder %s57, %s60
      %p69 = scmp.eq.s32.totalorder %s26, 1
      %p70 = por %p68, %p69
      %p71 = scmp.ne.s32.totalorder %s60, %s61
      %p72 = scmp.eq.s32.totalorder %s26, 0
      %p73 = por %p71, %p72
      %p74 = scmp.ne.s32.totalorder %s60, %s61
      %p75 = scmp.eq.s32.totalorder %s27, 1
      %p76 = por %p74, %p75
      %p78 = scmp.ne.s32.totalorder %s61, %s77
      %p79 = scmp.eq.s32.totalorder %s27, 0
      %p80 = por %p78, %p79
      %s82 = sadd.s32 %s81, 1
      %p85 = scmp.eq.s32.totalorder %s21, 1
      %p86 = scmp.ne.s32.totalorder %s81, %s83
      %p87 = scmp.eq.s32.totalorder %s21, 0
      %p88 = por %p86, %p87
      %p89 = scmp.ne.s32.totalorder %s81, %s83
      %p90 = scmp.eq.s32.totalorder %s26, 1
      %p91 = por %p89, %p90
      %p92 = scmp.ne.s32.totalorder %s83, %s84
      %p93 = scmp.eq.s32.totalorder %s26, 0
      %p94 = por %p92, %p93
      %p95 = scmp.ne.s32.totalorder %s83, %s84
      %p96 = scmp.eq.s32.totalorder %s27, 1
      %p97 = por %p95, %p96
      %p99 = scmp.ne.s32.totalorder %s84, %s98
      %p100 = scmp.eq.s32.totalorder %s27, 0
      %p101 = por %p99, %p100
      %s103 = sadd.s32 %s102, 1
      %p106 = scmp.eq.s32.totalorder %s21, 1
      %p107 = scmp.ne.s32.totalorder %s102, %s104
      %p108 = scmp.eq.s32.totalorder %s21, 0
      %p109 = por %p107, %p108
      %p110 = scmp.ne.s32.totalorder %s102, %s104
      %p111 = scmp.eq.s32.totalorder %s26, 1
      %p112 = por %p110, %p111
      %p113 = scmp.ne.s32.totalorder %s104, %s105
      %p114 = scmp.eq.s32.totalorder %s26, 0
      %p115 = por %p113, %p114
      %p116 = scmp.ne.s32.totalorder %s104, %s105
      %p117 = scmp.eq.s32.totalorder %s27, 1
      %p118 = por %p116, %p117
      %p120 = scmp.ne.s32.totalorder %s105, %s119
      %p121 = scmp.eq.s32.totalorder %s27, 0
      %p122 = por %p120, %p121
      %s124 = sadd.s32 %s123, 1
      %p127 = scmp.eq.s32.totalorder %s21, 1
      %p128 = scmp.ne.s32.totalorder %s123, %s125
      %p129 = scmp.eq.s32.totalorder %s21, 0
      %p130 = por %p128, %p129
      %p131 = scmp.ne.s32.totalorder %s123, %s125
      %p132 = scmp.eq.s32.totalorder %s26, 1
      %p133 = por %p131, %p132
      %p134 = scmp.ne.s32.totalorder %s125, %s126
      %p135 = scmp.eq.s32.totalorder %s26, 0
      %p136 = por %p134, %p135
      %p137 = scmp.ne.s32.totalorder %s125, %s126
      %p138 = scmp.eq.s32.totalorder %s27, 1
      %p139 = por %p137, %p138
      %p141 = scmp.ne.s32.totalorder %s126, %s140
      %p142 = scmp.eq.s32.totalorder %s27, 0
      %p143 = por %p141, %p142
      %s145 = sadd.s32 %s144, 1
      %p148 = scmp.eq.s32.totalorder %s21, 1
      %p149 = scmp.ne.s32.totalorder %s144, %s146
      %p150 = scmp.eq.s32.totalorder %s21, 0
      %p151 = por %p149, %p150
      %p152 = scmp.ne.s32.totalorder %s144, %s146
      %p153 = scmp.eq.s32.totalorder %s26, 1
      %p154 = por %p152, %p153
      %p155 = scmp.ne.s32.totalorder %s146, %s147
      %p156 = scmp.eq.s32.totalorder %s26, 0
      %p157 = por %p155, %p156
      %p158 = scmp.ne.s32.totalorder %s146, %s147
      %p159 = scmp.eq.s32.totalorder %s27, 1
      %p160 = por %p158, %p159
      %p162 = scmp.ne.s32.totalorder %s147, %s161
      %p163 = scmp.eq.s32.totalorder %s27, 0
      %p164 = por %p162, %p163
      %s166 = sadd.s32 %s165, 1
      %p169 = scmp.eq.s32.totalorder %s21, 1
      %p170 = scmp.ne.s32.totalorder %s165, %s167
      %p171 = scmp.eq.s32.totalorder %s21, 0
      %p172 = por %p170, %p171
      %p173 = scmp.ne.s32.totalorder %s165, %s167
      %p174 = scmp.eq.s32.totalorder %s26, 1
      %p175 = por %p173, %p174
      %p176 = scmp.ne.s32.totalorder %s167, %s168
      %p177 = scmp.eq.s32.totalorder %s26, 0
      %p178 = por %p176, %p177
      %p179 = scmp.ne.s32.totalorder %s167, %s168
      %p180 = scmp.eq.s32.totalorder %s27, 1
      %p181 = por %p179, %p180
      %p183 = scmp.ne.s32.totalorder %s168, %s182
      %p184 = scmp.eq.s32.totalorder %s27, 0
      %p185 = por %p183, %p184
      %s186 = ssub.s32 %s21, %s28
      %p187 = scmp.eq.s32.totalorder %s186, 0
      %s189 = sadd.s32 %s188, 1
      %s190 = scalar_select %p187, %s188, %s189
      %p193 = pneg %p187
      %p194 = scmp.eq.s32.totalorder %s21, 1
      %p195 = por %p193, %p194
      %p196 = scmp.ne.s32.totalorder %s188, %s191
      %p197 = scmp.eq.s32.totalorder %s21, 0
      %p198 = por %p196, %p197
      %p199 = scmp.ne.s32.totalorder %s188, %s191
      %p200 = scmp.eq.s32.totalorder %s26, 1
      %p201 = por %p199, %p200
      %p202 = scmp.ne.s32.totalorder %s191, %s192
      %p203 = scmp.eq.s32.totalorder %s26, 0
      %p204 = por %p202, %p203
      %p205 = scmp.ne.s32.totalorder %s191, %s192
      %p206 = scmp.eq.s32.totalorder %s27, 1
      %p207 = por %p205, %p206
      %p209 = scmp.ne.s32.totalorder %s192, %s208
      %p210 = scmp.eq.s32.totalorder %s27, 0
      %p211 = por %p209, %p210
      %p212 = scmp.le.s32.totalorder 1, %s21
      %p213 = scmp.lt.s32.totalorder %s21, 3
      %p214 = pnand %p212, %p213
      %p215 = pneg %p214
      // Predicated region
      $region9: #{tpu_custom_call.1} parent=5 // pred_check
        _
      $region10: #{tpu_custom_call.1} parent=5 // pred_check_branch
        %217 = sbr.rel (%p214) target = $region12
      $region11: #{tpu_custom_call.1} parent=5 // pred_region
        %s218 = ssub.s32 %s21, 1
        // Predicated region
        $region13: #{tpu_custom_call.1} parent=11 // pred_check
          %p219 = pneg %p94
        $region14: #{tpu_custom_call.1} parent=11 // pred_check_branch
          %221 = sbr.rel (%p219) target = $region16
        $region15: #{tpu_custom_call.1} parent=11 // pred_region
          %223 = vsyncadd [#allocation7], 0
          %s224 = sshll.u32 %s2, 4
          %s225 = int_to_ptr.hbm [resolvable:$true] %s224
          %s226 = sshll.u32 [#allocation6], 4
          %s227 = int_to_ptr.vmem [resolvable:$true] %s226
          %232 = dma.hbm_to_vmem [thread:$0]  %s225, 256, %s227, [#allocation7], 128, 128, 8
        $region16: #{tpu_custom_call.1} parent=11 // pred_fallthru
          _
        // Predicated region
        $region17: #{tpu_custom_call.1} parent=11 // pred_check
          %p233 = pneg %p115
        $region18: #{tpu_custom_call.1} parent=11 // pred_check_branch
          %235 = sbr.rel (%p233) target = $region20
        $region19: #{tpu_custom_call.1} parent=11 // pred_region
          _
        $region20: #{tpu_custom_call.1} parent=11 // pred_fallthru
          _
        // Predicated region
        $region21: #{tpu_custom_call.1} parent=11 // pred_check
          %p236 = pneg %p136
        $region22: #{tpu_custom_call.1} parent=11 // pred_check_branch
          %238 = sbr.rel (%p236) target = $region24
        $region23: #{tpu_custom_call.1} parent=11 // pred_region
          _
        $region24: #{tpu_custom_call.1} parent=11 // pred_fallthru
          _
        // Predicated region
        $region25: #{tpu_custom_call.1} parent=11 // pred_check
          %p239 = pneg %p157
        $region26: #{tpu_custom_call.1} parent=11 // pred_check_branch
          %241 = sbr.rel (%p239) target = $region28
        $region27: #{tpu_custom_call.1} parent=11 // pred_region
          %243 = vsyncadd [#allocation7], 0
          %s244 = sshll.u32 %s5, 4
          %s245 = int_to_ptr.hbm [resolvable:$true] %s244
          %s246 = sshll.u32 [#allocation8], 4
          %s247 = int_to_ptr.vmem [resolvable:$true] %s246
          %252 = dma.hbm_to_vmem [thread:$0]  %s245, 3072, %s247, [#allocation7], 192, 192, 12
        $region28: #{tpu_custom_call.1} parent=11 // pred_fallthru
          _
        // Predicated region
        $region29: #{tpu_custom_call.1} parent=11 // pred_check
          %p253 = pneg %p178
        $region30: #{tpu_custom_call.1} parent=11 // pred_check_branch
          %255 = sbr.rel (%p253) target = $region32
        $region31: #{tpu_custom_call.1} parent=11 // pred_region
          %257 = vsyncadd [#allocation10], 0
          %s258 = sshll.u32 %s6, 4
          %s259 = int_to_ptr.hbm [resolvable:$true] %s258
          %s260 = sshll.u32 [#allocation9], 4
          %s261 = int_to_ptr.vmem [resolvable:$true] %s260
          %266 = dma.hbm_to_vmem [thread:$0]  %s259, 1024, %s261, [#allocation10], 64, 64, 4
        $region32: #{tpu_custom_call.1} parent=11 // pred_fallthru
          _
      $region12: #{tpu_custom_call.1} parent=5 // pred_fallthru
        _
      %p267 = scmp.lt.s32.totalorder %s21, 2
      // Predicated region
      $region33: #{tpu_custom_call.1} parent=5 // pred_check
        %p268 = pneg %p267
      $region34: #{tpu_custom_call.1} parent=5 // pred_check_branch
        %270 = sbr.rel (%p268) target = $region36
      $region35: #{tpu_custom_call.1} parent=5 // pred_region
        // Predicated region
        $region37: #{tpu_custom_call.1} parent=35 // pred_check
          %p271 = pneg %p41
        $region38: #{tpu_custom_call.1} parent=35 // pred_check_branch
          %273 = sbr.rel (%p271) target = $region40
        $region39: #{tpu_custom_call.1} parent=35 // pred_region
          %s274 = sand.u32 %s31, 1
          %s275 = scalar_lea.sflag [#allocation4], %s274
          %s276 = sand.u32 %s31, 1
          %s277 = smul.addr %s276, 16
          %s278 = scalar_lea.vmem [#allocation3], %s277
          %280 = vsyncadd %s275, 0
          %s281 = smul.addr %s21, 2
          %s282 = smul.addr %s281, 8
          %s283 = scalar_lea.hbm %s0, %s282
          %s284 = sshll.u32 %s283, 4
          %s285 = int_to_ptr.hbm [resolvable:$true] %s284
          %s286 = sshll.u32 %s278, 4
          %s287 = int_to_ptr.vmem [resolvable:$true] %s286
          %292 = dma.hbm_to_vmem [thread:$0]  %s285, 256, %s287, %s275, 128, 128, 8
        $region40: #{tpu_custom_call.1} parent=35 // pred_fallthru
          _
        // Predicated region
        $region41: #{tpu_custom_call.1} parent=35 // pred_check
          %p293 = pneg %p67
        $region42: #{tpu_custom_call.1} parent=35 // pred_check_branch
          %295 = sbr.rel (%p293) target = $region44
        $region43: #{tpu_custom_call.1} parent=35 // pred_region
          %p296 = scmp.lt.s32.totalorder %s21, 1
          %s297 = scalar_select %p296, %s21, 1
          %s298 = smul.addr %s297, 4
          %s299 = scalar_lea.vmem %s1, %s298
        $region44: #{tpu_custom_call.1} parent=35 // pred_fallthru
          _
      $region36: #{tpu_custom_call.1} parent=5 // pred_fallthru
        _
      %p300 = scmp.le.s32.totalorder 1, %s21
      %p301 = scmp.lt.s32.totalorder %s21, 3
      %p302 = pnand %p300, %p301
      %p303 = pneg %p302
      // Predicated region
      $region45: #{tpu_custom_call.1} parent=5 // pred_check
        _
      $region46: #{tpu_custom_call.1} parent=5 // pred_check_branch
        %305 = sbr.rel (%p302) target = $region48
      $region47: #{tpu_custom_call.1} parent=5 // pred_region
        %s306 = ssub.s32 %s21, 1
        %s307 = sand.u32 %s34, 1
        %s308 = scalar_lea.sflag [#allocation4], %s307
        %s309 = sand.u32 %s34, 1
        %s310 = smul.addr %s309, 16
        %s311 = scalar_lea.vmem [#allocation3], %s310
        // Predicated region
        $region49: #{tpu_custom_call.1} parent=47 // pred_check
          %p312 = pneg %p47
        $region50: #{tpu_custom_call.1} parent=47 // pred_check_branch
          %314 = sbr.rel (%p312) target = $region52
        $region51: #{tpu_custom_call.1} parent=47 // pred_region
          %316 = dma.done %s308, 256
        $region52: #{tpu_custom_call.1} parent=47 // pred_fallthru
          _
        // Predicated region
        $region53: #{tpu_custom_call.1} parent=47 // pred_check
          %p317 = pneg %p94
        $region54: #{tpu_custom_call.1} parent=47 // pred_check_branch
          %319 = sbr.rel (%p317) target = $region56
        $region55: #{tpu_custom_call.1} parent=47 // pred_region
          %321 = dma.done [#allocation7], 256
        $region56: #{tpu_custom_call.1} parent=47 // pred_fallthru
          _
        // Predicated region
        $region57: #{tpu_custom_call.1} parent=47 // pred_check
          %p322 = pneg %p157
        $region58: #{tpu_custom_call.1} parent=47 // pred_check_branch
          %324 = sbr.rel (%p322) target = $region60
        $region59: #{tpu_custom_call.1} parent=47 // pred_region
          %326 = dma.done [#allocation7], 3072
        $region60: #{tpu_custom_call.1} parent=47 // pred_fallthru
          _
        // Predicated region
        $region61: #{tpu_custom_call.1} parent=47 // pred_check
          %p327 = pneg %p178
        $region62: #{tpu_custom_call.1} parent=47 // pred_check_branch
          %329 = sbr.rel (%p327) target = $region64
        $region63: #{tpu_custom_call.1} parent=47 // pred_region
          %331 = dma.done [#allocation10], 1024
        $region64: #{tpu_custom_call.1} parent=47 // pred_fallthru
          _
        %s332 = sand.u32 %s34, 1
        %s333 = scalar_lea.sflag [#allocation4], %s332
        %s334 = sand.u32 %s34, 1
        %s335 = smul.addr %s334, 16
        %s336 = scalar_lea.vmem [#allocation3], %s335
        %p337 = pneg %p47
        %p338 = pneg %p44
        %p339 = scmp.lt.s32.totalorder %s26, 1
        %s340 = scalar_select %p339, %s26, 1
        %s341 = smul.addr %s340, 4
        %s342 = scalar_lea.vmem %s1, %s341
        %p343 = pneg %p73
        %p344 = pneg %p70
        %p345 = pneg %p94
        %p346 = pneg %p91
        %p347 = pneg %p115
        %p348 = pneg %p112
        %p349 = pneg %p136
        %p350 = pneg %p133
        %p351 = pneg %p157
        %p352 = pneg %p154
        %p353 = pneg %p178
        %p354 = pneg %p175
        %p355 = pneg %p204
        %p356 = pneg %p201
        %s357 = sand.u32 %s191, 1
        %s358 = scalar_lea.sflag [#allocation5], %s357
        %s359 = sand.u32 %s191, 1
        %s360 = smul.addr %s359, 16
        %s361 = scalar_lea.vmem [#allocation11], %s360
        %p362 = scmp.lt.s32.totalorder %s26, 1
        %s363 = scalar_select %p362, %s26, 1
        %s364 = smul.addr %s363, 4
        %s365 = scalar_lea.vmem %s1, %s364
        %v367 = vld [vmem:[%s311] sm:$0xff]
        %v368 = vld [vmem:[%s311 + $0x8] sm:$0xff]
        %v369 = vld [vmem:[%s365] sm:$0x7]
        %v370 = vadd.f32 %v369, 1.0
        %v371 = vld [vmem:[%s4] sm:$0x1]
        %372 = vadd.xlane.f32.xlu0 %v367
        %v373 = vpop.xlane.xlu0 %372
        %374 = vadd.xlane.f32.xlu0 %v368
        %v375 = vpop.xlane.xlu0 %374
        %v376 = vrcp.pop 128.0
        %v377 = vmul.f32 128.0, %v376
        %v378 = vsub.f32 1.0, %v377
        %v379 = vmul.f32 %v376, %v378
        %v380 = vadd.f32 %v376, %v379
        %vm381 = vweird.f32 %v376
        %v382 = vsel %vm381, %v376, %v380
        %v383 = vmul.f32 %v373, %v382
        %v384 = vmul.f32 %v375, %v382
        %v385 = vsub.f32 %v367, %v383
        %v386 = vsub.f32 %v368, %v384
        %v387 = vmul.f32 %v385, %v385
        %v388 = vmul.f32 %v386, %v386
        %389 = vadd.xlane.f32.xlu0 %v387
        %v390 = vpop.xlane.xlu0 %389
        %391 = vadd.xlane.f32.xlu0 %v388
        %v392 = vpop.xlane.xlu0 %391
        %v393 = vmul.f32 %v390, %v382
        %v394 = vmul.f32 %v392, %v382
        %v395 = vadd.f32 %v393, 1e-05
        %v396 = vadd.f32 %v394, 1e-05
        %v397 = vrsqrt.pop %v395
        %v398 = vmul.f32 %v397, %v395
        %v399 = vmul.f32 %v398, %v397
        %v400 = vmul.f32 0.5, %v399
        %v401 = vsub.f32 1.5, %v400
        %v402 = vmul.f32 %v397, %v401
        %vm403 = vweird.f32 %v395
        %vm404 = vweird.f32 %v397
        %vm405 = vmor %vm403, %vm404
        %v406 = vsel %vm405, %v397, %v402
        %v407 = vrsqrt.pop %v396
        %v408 = vmul.f32 %v407, %v396
        %v409 = vmul.f32 %v408, %v407
        %v410 = vmul.f32 0.5, %v409
        %v411 = vsub.f32 1.5, %v410
        %v412 = vmul.f32 %v407, %v411
        %vm413 = vweird.f32 %v396
        %vm414 = vweird.f32 %v407
        %vm415 = vmor %vm413, %vm414
        %v416 = vsel %vm415, %v407, %v412
        %v417 = vmul.f32 %v385, %v406
        %v418 = vmul.f32 %v386, %v416
        %v420 = vperm.slane %v371, 0
        %v422 = vmul.f32 %v417, %v420
        %v423 = vmul.f32 %v418, %v420
        %v424 = vperm.slane %v370, 1
        %v425 = vmul.f32 %v422, %v424
        %v426 = vmul.f32 %v423, %v424
        %v427 = vperm.slane %v369, 0
        %v428 = vadd.f32 %v425, %v427
        %v429 = vadd.f32 %v426, %v427
        %v430 = vpack.c.bf16 %v429, %v428
        %v431 = vld [vmem:[#allocation8] sm:$0xff]
        %v432 = vld [vmem:[#allocation8 + $0x8] sm:$0xf]
        %v433 = vld [vmem:[#allocation8 + $0xc] sm:$0xff]
        %v434 = vld [vmem:[#allocation8 + $0x14] sm:$0xf]
        %v435 = vld [vmem:[#allocation8 + $0x18] sm:$0xff]
        %v436 = vld [vmem:[#allocation8 + $0x20] sm:$0xf]
        %v437 = vld [vmem:[#allocation8 + $0x24] sm:$0xff]
        %v438 = vld [vmem:[#allocation8 + $0x2c] sm:$0xf]
        %v439 = vld [vmem:[#allocation8 + $0x30] sm:$0xff]
        %v440 = vld [vmem:[#allocation8 + $0x38] sm:$0xf]
        %v441 = vld [vmem:[#allocation8 + $0x3c] sm:$0xff]
        %v442 = vld [vmem:[#allocation8 + $0x44] sm:$0xf]
        %v443 = vld [vmem:[#allocation8 + $0x48] sm:$0xff]
        %v444 = vld [vmem:[#allocation8 + $0x50] sm:$0xf]
        %v445 = vld [vmem:[#allocation8 + $0x54] sm:$0xff]
        %v446 = vld [vmem:[#allocation8 + $0x5c] sm:$0xf]
        %v447 = vld [vmem:[#allocation8 + $0x60] sm:$0xff]
        %v448 = vld [vmem:[#allocation8 + $0x68] sm:$0xf]
        %v449 = vld [vmem:[#allocation8 + $0x6c] sm:$0xff]
        %v450 = vld [vmem:[#allocation8 + $0x74] sm:$0xf]
        %v451 = vld [vmem:[#allocation8 + $0x78] sm:$0xff]
        %v452 = vld [vmem:[#allocation8 + $0x80] sm:$0xf]
        %v453 = vld [vmem:[#allocation8 + $0x84] sm:$0xff]
        %v454 = vld [vmem:[#allocation8 + $0x8c] sm:$0xf]
        %v455 = vld [vmem:[#allocation8 + $0x90] sm:$0xff]
        %v456 = vld [vmem:[#allocation8 + $0x98] sm:$0xf]
        %v457 = vld [vmem:[#allocation8 + $0x9c] sm:$0xff]
        %v458 = vld [vmem:[#allocation8 + $0xa4] sm:$0xf]
        %v459 = vld [vmem:[#allocation8 + $0xa8] sm:$0xff]
        %v460 = vld [vmem:[#allocation8 + $0xb0] sm:$0xf]
        %v461 = vld [vmem:[#allocation8 + $0xb4] sm:$0xff]
        %v462 = vld [vmem:[#allocation8 + $0xbc] sm:$0xf]
        %v495 = vunpack.c.l.b16 %v431
        %v496 = vunpack.c.h.b16 %v431
        %v497 = vunpack.c.l.b16 %v432
        %v498 = vunpack.c.l.b16 %v433
        %v499 = vunpack.c.h.b16 %v433
        %v500 = vunpack.c.l.b16 %v434
        %v501 = vunpack.c.l.b16 %v435
        %v502 = vunpack.c.h.b16 %v435
        %v503 = vunpack.c.l.b16 %v436
        %v504 = vunpack.c.l.b16 %v437
        %v505 = vunpack.c.h.b16 %v437
        %v506 = vunpack.c.l.b16 %v438
        %v507 = vunpack.c.l.b16 %v439
        %v508 = vunpack.c.h.b16 %v439
        %v509 = vunpack.c.l.b16 %v440
        %v510 = vunpack.c.l.b16 %v441
        %v511 = vunpack.c.h.b16 %v441
        %v512 = vunpack.c.l.b16 %v442
        %v513 = vunpack.c.l.b16 %v443
        %v514 = vunpack.c.h.b16 %v443
        %v515 = vunpack.c.l.b16 %v444
        %v516 = vunpack.c.l.b16 %v445
        %v517 = vunpack.c.h.b16 %v445
        %v518 = vunpack.c.l.b16 %v446
        %v519 = vunpack.c.l.b16 %v447
        %v520 = vunpack.c.h.b16 %v447
        %v521 = vunpack.c.l.b16 %v448
        %v522 = vunpack.c.l.b16 %v449
        %v523 = vunpack.c.h.b16 %v449
        %v524 = vunpack.c.l.b16 %v450
        %v525 = vunpack.c.l.b16 %v451
        %v526 = vunpack.c.h.b16 %v451
        %v527 = vunpack.c.l.b16 %v452
        %v528 = vunpack.c.l.b16 %v453
        %v529 = vunpack.c.h.b16 %v453
        %v530 = vunpack.c.l.b16 %v454
        %v531 = vunpack.c.l.b16 %v455
        %v532 = vunpack.c.h.b16 %v455
        %v533 = vunpack.c.l.b16 %v456
        %v534 = vunpack.c.l.b16 %v457
        %v535 = vunpack.c.h.b16 %v457
        %v536 = vunpack.c.l.b16 %v458
        %v537 = vunpack.c.l.b16 %v459
        %v538 = vunpack.c.h.b16 %v459
        %v539 = vunpack.c.l.b16 %v460
        %v540 = vunpack.c.l.b16 %v461
        %v541 = vunpack.c.h.b16 %v461
        %v542 = vunpack.c.l.b16 %v462
        %v543 = vpack.c.b16 %v498, %v495
        %v544 = vpack.c.b16 %v499, %v496
        %v545 = vpack.c.b16 %v500, %v497
        %v546 = vpack.c.b16 %v504, %v501
        %v547 = vpack.c.b16 %v505, %v502
        %v548 = vpack.c.b16 %v506, %v503
        %v549 = vpack.c.b16 %v510, %v507
        %v550 = vpack.c.b16 %v511, %v508
        %v551 = vpack.c.b16 %v512, %v509
        %v552 = vpack.c.b16 %v516, %v513
        %v553 = vpack.c.b16 %v517, %v514
        %v554 = vpack.c.b16 %v518, %v515
        %v555 = vpack.c.b16 %v522, %v519
        %v556 = vpack.c.b16 %v523, %v520
        %v557 = vpack.c.b16 %v524, %v521
        %v558 = vpack.c.b16 %v528, %v525
        %v559 = vpack.c.b16 %v529, %v526
        %v560 = vpack.c.b16 %v530, %v527
        %v561 = vpack.c.b16 %v534, %v531
        %v562 = vpack.c.b16 %v535, %v532
        %v563 = vpack.c.b16 %v536, %v533
        %v564 = vpack.c.b16 %v540, %v537
        %v565 = vpack.c.b16 %v541, %v538
        %v566 = vpack.c.b16 %v542, %v539
        %591 = vmatpush.bf16.msra.mxu0 %v564
        %592 = vmatpush.bf16.msra.mxu0 %v561
        %593 = vmatpush.bf16.msra.mxu0 %v558
        %594 = vmatpush.bf16.msra.mxu0 %v555
        %595 = vmatpush.bf16.msra.mxu0 %v552
        %596 = vmatpush.bf16.msra.mxu0 %v549
        %597 = vmatpush.bf16.msra.mxu0 %v546
        %598 = vmatpush.bf16.msra.mxu0 %v543
        %599 = vmatmul.bf16.gmra.mxu0 %v430
        %v600 = vpop.f32.mrf.mxu0
        %v601 = vadd.f32 0.0, %v600
        %v602 = vpop.f32.mrf.mxu0
        %v603 = vadd.f32 0.0, %v602
        %604 = vdwg.mxu0
        %605 = vmatpush.bf16.msra.mxu0 %v565
        %606 = vmatpush.bf16.msra.mxu0 %v562
        %607 = vmatpush.bf16.msra.mxu0 %v559
        %608 = vmatpush.bf16.msra.mxu0 %v556
        %609 = vmatpush.bf16.msra.mxu0 %v553
        %610 = vmatpush.bf16.msra.mxu0 %v550
        %611 = vmatpush.bf16.msra.mxu0 %v547
        %612 = vmatpush.bf16.msra.mxu0 %v544
        %613 = vmatmul.bf16.gmra.mxu0 %v430
        %v614 = vpop.f32.mrf.mxu0
        %v615 = vadd.f32 0.0, %v614
        %v616 = vpop.f32.mrf.mxu0
        %v617 = vadd.f32 0.0, %v616
        %618 = vdwg.mxu0
        %619 = vmatpush.bf16.msra.mxu0 %v566
        %620 = vmatpush.bf16.msra.mxu0 %v563
        %621 = vmatpush.bf16.msra.mxu0 %v560
        %622 = vmatpush.bf16.msra.mxu0 %v557
        %623 = vmatpush.bf16.msra.mxu0 %v554
        %624 = vmatpush.bf16.msra.mxu0 %v551
        %625 = vmatpush.bf16.msra.mxu0 %v548
        %626 = vmatpush.bf16.msra.mxu0 %v545
        %627 = vmatmul.bf16.gmra.mxu0 %v430
        %v628 = vpop.f32.mrf.mxu0
        %v629 = vadd.f32 0.0, %v628
        %v630 = vpop.f32.mrf.mxu0
        %v631 = vadd.f32 0.0, %v630
        %632 = vdwg.mxu0
        %v633 = vmul.f32 %v601, 0.17677669
        %v634 = vmul.f32 %v603, 0.17677669
        %v635 = vld [vmem:[#allocation6] sm:$0xff]
        %v636 = vld [vmem:[#allocation6 + $0x8] sm:$0xff]
        %v637 = vld [vmem:[%s3] sm:$0xff]
        %v638 = vld [vmem:[%s3 + $0x8] sm:$0xff]
        %v639 = vmul.f32 %v633, %v635
        %v640 = vmul.f32 %v634, %v636
        %643 = vrot.lane.b32.xlu0 %v633, 112
        %v644 = vpop.permute.xlu0 %643
        %645 = vrot.lane.b32.xlu0 %v634, 112
        %v646 = vpop.permute.xlu0 %645
        %649 = vrot.lane.b32.xlu0 %v633, 16
        %v650 = vpop.permute.xlu0 %649
        %651 = vrot.lane.b32.xlu0 %v634, 16
        %v652 = vpop.permute.xlu0 %651
        %vm655 = vcmask 130048
        %v656 = vsel %vm655, %v644, %v650
        %v657 = vsel %vm655, %v646, %v652
        %v658 = vmul.f32 %v656, %v637
        %v659 = vmul.f32 %v657, %v638
        %v660 = vadd.f32 %v639, %v658
        %v661 = vadd.f32 %v640, %v659
        %v662 = vmul.f32 %v615, %v635
        %v663 = vmul.f32 %v617, %v636
        %666 = vrot.lane.b32.xlu0 %v615, 112
        %v667 = vpop.permute.xlu0 %666
        %668 = vrot.lane.b32.xlu0 %v617, 112
        %v669 = vpop.permute.xlu0 %668
        %672 = vrot.lane.b32.xlu0 %v615, 16
        %v673 = vpop.permute.xlu0 %672
        %674 = vrot.lane.b32.xlu0 %v617, 16
        %v675 = vpop.permute.xlu0 %674
        %v678 = vsel %vm655, %v667, %v673
        %v679 = vsel %vm655, %v669, %v675
        %v680 = vmul.f32 %v678, %v637
        %v681 = vmul.f32 %v679, %v638
        %v682 = vadd.f32 %v662, %v680
        %v683 = vadd.f32 %v663, %v681
        %v684 = vpack.c.bf16 %v661, %v660
        %v685 = vpack.c.bf16 %v683, %v682
        %vm686 = vcmask 261120
        %v688 = vsel %vm686, %v684, 0
        %v691 = vsel %vm686, %v685, 0
        %693 = vmatpush.bf16.xpose.msra.mxu0 0
        %694 = vmatpush.bf16.xpose.msra.mxu0 0
        %695 = vmatpush.bf16.xpose.msra.mxu0 0
        %696 = vmatpush.bf16.xpose.msra.mxu0 0
        %697 = vmatpush.bf16.xpose.msra.mxu0 0
        %698 = vmatpush.bf16.xpose.msra.mxu0 0
        %699 = vmatpush.bf16.xpose.msra.mxu0 0
        %700 = vmatpush.bf16.xpose.msra.mxu0 %v691
        %701 = vmatmul.bf16.gmra.mxu0 %v688
        %v702 = vpop.f32.mrf.mxu0
        %v703 = vadd.f32 0.0, %v702
        %v704 = vpop.f32.mrf.mxu0
        %v705 = vadd.f32 0.0, %v704
        %706 = vdwg.mxu0
        %v707 = vsel %vm655, %v703, -inf
        %708 = vmax.xlane.f32.xlu0 %v707
        %v709 = vpop.xlane.xlu0 %708
        %v710 = vsel %vm655, %v705, -inf
        %711 = vmax.xlane.f32.xlu0 %v710
        %v712 = vpop.xlane.xlu0 %711
        %v713 = vsub.f32 %v703, %v709
        %v714 = vsub.f32 %v705, %v712
        %v715 = vmul.f32 %v713, 1.442695
        %v716 = vpow.pop %v715
        %v717 = vmul.f32 %v714, 1.442695
        %v718 = vpow.pop %v717
        %v719 = vsel %vm655, %v716, 0.0
        %720 = vadd.xlane.f32.xlu0 %v719
        %v721 = vpop.xlane.xlu0 %720
        %v722 = vsel %vm655, %v718, 0.0
        %723 = vadd.xlane.f32.xlu0 %v722
        %v724 = vpop.xlane.xlu0 %723
        %v725 = vrcp.pop %v721
        %v726 = vrcp.pop %v724
        %v727 = vmul.f32 %v716, %v725
        %v728 = vmul.f32 %v718, %v726
        %v729 = vpack.c.bf16 %v728, %v727
        %v730 = vpack.c.bf16 %v631, %v629
        %v732 = vsel %vm655, %v729, 0
        %734 = vmatpush.bf16.msra.mxu0 0
        %735 = vmatpush.bf16.msra.mxu0 0
        %736 = vmatpush.bf16.msra.mxu0 0
        %737 = vmatpush.bf16.msra.mxu0 0
        %738 = vmatpush.bf16.msra.mxu0 0
        %739 = vmatpush.bf16.msra.mxu0 0
        %740 = vmatpush.bf16.msra.mxu0 0
        %741 = vmatpush.bf16.msra.mxu0 %v730
        %742 = vmatmul.bf16.gmra.mxu0 %v732
        %v743 = vpop.f32.mrf.mxu0
        %v744 = vadd.f32 0.0, %v743
        %v745 = vpop.f32.mrf.mxu0
        %v746 = vadd.f32 0.0, %v745
        %747 = vdwg.mxu0
        %748 = vst.msk [vmem:[#allocation2] sm:$0xff] %vm686, %v744
        %749 = vst.msk [vmem:[#allocation2 + $0x8] sm:$0xff] %vm686, %v746
        %752 = vrot.lane.b32.xlu0 %v635, 32
        %v753 = vpop.permute.xlu0 %752
        %754 = vrot.lane.b32.xlu0 %v636, 32
        %v755 = vpop.permute.xlu0 %754
        %v758 = vmul.f32 %v633, %v753
        %v759 = vmul.f32 %v634, %v755
        %760 = vrot.lane.b32.xlu0 %v633, 80
        %v761 = vpop.permute.xlu0 %760
        %762 = vrot.lane.b32.xlu0 %v634, 80
        %v763 = vpop.permute.xlu0 %762
        %v766 = vsel %vm655, %v761, %v644
        %v767 = vsel %vm655, %v763, %v646
        %v768 = vmul.f32 %v766, %v637
        %v769 = vmul.f32 %v767, %v638
        %772 = vrot.lane.b32.xlu0 %v768, 32
        %v773 = vpop.permute.xlu0 %772
        %774 = vrot.lane.b32.xlu0 %v769, 32
        %v775 = vpop.permute.xlu0 %774
        %v778 = vadd.f32 %v758, %v773
        %v779 = vadd.f32 %v759, %v775
        %v780 = vmul.f32 %v615, %v753
        %v781 = vmul.f32 %v617, %v755
        %782 = vrot.lane.b32.xlu0 %v615, 80
        %v783 = vpop.permute.xlu0 %782
        %784 = vrot.lane.b32.xlu0 %v617, 80
        %v785 = vpop.permute.xlu0 %784
        %v788 = vsel %vm655, %v783, %v667
        %v789 = vsel %vm655, %v785, %v669
        %v790 = vmul.f32 %v788, %v637
        %v791 = vmul.f32 %v789, %v638
        %794 = vrot.lane.b32.xlu0 %v790, 32
        %v795 = vpop.permute.xlu0 %794
        %796 = vrot.lane.b32.xlu0 %v791, 32
        %v797 = vpop.permute.xlu0 %796
        %v800 = vadd.f32 %v780, %v795
        %v801 = vadd.f32 %v781, %v797
        %v802 = vpack.c.bf16 %v779, %v778
        %v803 = vpack.c.bf16 %v801, %v800
        %805 = vrot.lane.b32.xlu0 %v802, 96
        %v806 = vpop.permute.xlu0 %805
        %808 = vrot.lane.b32.xlu0 %v803, 96
        %v809 = vpop.permute.xlu0 %808
        %v811 = vsel %vm686, %v806, 0
        %v814 = vsel %vm686, %v809, 0
        %816 = vmatpush.bf16.xpose.msra.mxu0 0
        %817 = vmatpush.bf16.xpose.msra.mxu0 0
        %818 = vmatpush.bf16.xpose.msra.mxu0 0
        %819 = vmatpush.bf16.xpose.msra.mxu0 0
        %820 = vmatpush.bf16.xpose.msra.mxu0 0
        %821 = vmatpush.bf16.xpose.msra.mxu0 0
        %822 = vmatpush.bf16.xpose.msra.mxu0 0
        %823 = vmatpush.bf16.xpose.msra.mxu0 %v814
        %824 = vmatmul.bf16.gmra.mxu0 %v811
        %v825 = vpop.f32.mrf.mxu0
        %v826 = vadd.f32 0.0, %v825
        %v827 = vpop.f32.mrf.mxu0
        %v828 = vadd.f32 0.0, %v827
        %829 = vdwg.mxu0
        %v830 = vsel %vm655, %v826, -inf
        %831 = vmax.xlane.f32.xlu0 %v830
        %v832 = vpop.xlane.xlu0 %831
        %v833 = vsel %vm655, %v828, -inf
        %834 = vmax.xlane.f32.xlu0 %v833
        %v835 = vpop.xlane.xlu0 %834
        %v836 = vsub.f32 %v826, %v832
        %v837 = vsub.f32 %v828, %v835
        %v838 = vmul.f32 %v836, 1.442695
        %v839 = vpow.pop %v838
        %v840 = vmul.f32 %v837, 1.442695
        %v841 = vpow.pop %v840
        %v842 = vsel %vm655, %v839, 0.0
        %843 = vadd.xlane.f32.xlu0 %v842
        %v844 = vpop.xlane.xlu0 %843
        %v845 = vsel %vm655, %v841, 0.0
        %846 = vadd.xlane.f32.xlu0 %v845
        %v847 = vpop.xlane.xlu0 %846
        %v848 = vrcp.pop %v844
        %v849 = vrcp.pop %v847
        %v850 = vmul.f32 %v839, %v848
        %v851 = vmul.f32 %v841, %v849
        %v852 = vpack.c.bf16 %v851, %v850
        %854 = vrot.lane.b32.xlu0 %v730, 96
        %v855 = vpop.permute.xlu0 %854
        %v858 = vsel %vm655, %v852, 0
        %860 = vmatpush.bf16.msra.mxu0 0
        %861 = vmatpush.bf16.msra.mxu0 0
        %862 = vmatpush.bf16.msra.mxu0 0
        %863 = vmatpush.bf16.msra.mxu0 0
        %864 = vmatpush.bf16.msra.mxu0 0
        %865 = vmatpush.bf16.msra.mxu0 0
        %866 = vmatpush.bf16.msra.mxu0 0
        %867 = vmatpush.bf16.msra.mxu0 %v855
        %868 = vmatmul.bf16.gmra.mxu0 %v858
        %v869 = vpop.f32.mrf.mxu0
        %v870 = vadd.f32 0.0, %v869
        %v871 = vpop.f32.mrf.mxu0
        %v872 = vadd.f32 0.0, %v871
        %873 = vdwg.mxu0
        %876 = vrot.lane.b32.xlu0 %v870, 32
        %v877 = vpop.permute.xlu0 %876
        %878 = vrot.lane.b32.xlu0 %v872, 32
        %v879 = vpop.permute.xlu0 %878
        %vm882 = vcmask 523520
        %883 = vst.msk [vmem:[#allocation2] sm:$0xff] %vm882, %v877
        %884 = vst.msk [vmem:[#allocation2 + $0x8] sm:$0xff] %vm882, %v879
        %885 = vrot.lane.b32.xlu0 %v635, 64
        %v886 = vpop.permute.xlu0 %885
        %887 = vrot.lane.b32.xlu0 %v636, 64
        %v888 = vpop.permute.xlu0 %887
        %v891 = vmul.f32 %v633, %v886
        %v892 = vmul.f32 %v634, %v888
        %893 = vrot.lane.b32.xlu0 %v633, 48
        %v894 = vpop.permute.xlu0 %893
        %895 = vrot.lane.b32.xlu0 %v634, 48
        %v896 = vpop.permute.xlu0 %895
        %v899 = vsel %vm655, %v894, %v761
        %v900 = vsel %vm655, %v896, %v763
        %v901 = vmul.f32 %v899, %v637
        %v902 = vmul.f32 %v900, %v638
        %905 = vrot.lane.b32.xlu0 %v901, 64
        %v906 = vpop.permute.xlu0 %905
        %907 = vrot.lane.b32.xlu0 %v902, 64
        %v908 = vpop.permute.xlu0 %907
        %v911 = vadd.f32 %v891, %v906
        %v912 = vadd.f32 %v892, %v908
        %v913 = vmul.f32 %v615, %v886
        %v914 = vmul.f32 %v617, %v888
        %915 = vrot.lane.b32.xlu0 %v615, 48
        %v916 = vpop.permute.xlu0 %915
        %917 = vrot.lane.b32.xlu0 %v617, 48
        %v918 = vpop.permute.xlu0 %917
        %v921 = vsel %vm655, %v916, %v783
        %v922 = vsel %vm655, %v918, %v785
        %v923 = vmul.f32 %v921, %v637
        %v924 = vmul.f32 %v922, %v638
        %927 = vrot.lane.b32.xlu0 %v923, 64
        %v928 = vpop.permute.xlu0 %927
        %929 = vrot.lane.b32.xlu0 %v924, 64
        %v930 = vpop.permute.xlu0 %929
        %v933 = vadd.f32 %v913, %v928
        %v934 = vadd.f32 %v914, %v930
        %v935 = vpack.c.bf16 %v912, %v911
        %v936 = vpack.c.bf16 %v934, %v933
        %938 = vrot.lane.b32.xlu0 %v935, 64
        %v939 = vpop.permute.xlu0 %938
        %941 = vrot.lane.b32.xlu0 %v936, 64
        %v942 = vpop.permute.xlu0 %941
        %v944 = vsel %vm686, %v939, 0
        %v947 = vsel %vm686, %v942, 0
        %949 = vmatpush.bf16.xpose.msra.mxu0 0
        %950 = vmatpush.bf16.xpose.msra.mxu0 0
        %951 = vmatpush.bf16.xpose.msra.mxu0 0
        %952 = vmatpush.bf16.xpose.msra.mxu0 0
        %953 = vmatpush.bf16.xpose.msra.mxu0 0
        %954 = vmatpush.bf16.xpose.msra.mxu0 0
        %955 = vmatpush.bf16.xpose.msra.mxu0 0
        %956 = vmatpush.bf16.xpose.msra.mxu0 %v947
        %957 = vmatmul.bf16.gmra.mxu0 %v944
        %v958 = vpop.f32.mrf.mxu0
        %v959 = vadd.f32 0.0, %v958
        %v960 = vpop.f32.mrf.mxu0
        %v961 = vadd.f32 0.0, %v960
        %962 = vdwg.mxu0
        %v963 = vsel %vm655, %v959, -inf
        %964 = vmax.xlane.f32.xlu0 %v963
        %v965 = vpop.xlane.xlu0 %964
        %v966 = vsel %vm655, %v961, -inf
        %967 = vmax.xlane.f32.xlu0 %v966
        %v968 = vpop.xlane.xlu0 %967
        %v969 = vsub.f32 %v959, %v965
        %v970 = vsub.f32 %v961, %v968
        %v971 = vmul.f32 %v969, 1.442695
        %v972 = vpow.pop %v971
        %v973 = vmul.f32 %v970, 1.442695
        %v974 = vpow.pop %v973
        %v975 = vsel %vm655, %v972, 0.0
        %976 = vadd.xlane.f32.xlu0 %v975
        %v977 = vpop.xlane.xlu0 %976
        %v978 = vsel %vm655, %v974, 0.0
        %979 = vadd.xlane.f32.xlu0 %v978
        %v980 = vpop.xlane.xlu0 %979
        %v981 = vrcp.pop %v977
        %v982 = vrcp.pop %v980
        %v983 = vmul.f32 %v972, %v981
        %v984 = vmul.f32 %v974, %v982
        %v985 = vpack.c.bf16 %v984, %v983
        %986 = vrot.lane.b32.xlu0 %v730, 64
        %v987 = vpop.permute.xlu0 %986
        %v990 = vsel %vm655, %v985, 0
        %992 = vmatpush.bf16.msra.mxu0 0
        %993 = vmatpush.bf16.msra.mxu0 0
        %994 = vmatpush.bf16.msra.mxu0 0
        %995 = vmatpush.bf16.msra.mxu0 0
        %996 = vmatpush.bf16.msra.mxu0 0
        %997 = vmatpush.bf16.msra.mxu0 0
        %998 = vmatpush.bf16.msra.mxu0 0
        %999 = vmatpush.bf16.msra.mxu0 %v987
        %1000 = vmatmul.bf16.gmra.mxu0 %v990
        %v1001 = vpop.f32.mrf.mxu0
        %v1002 = vadd.f32 0.0, %v1001
        %v1003 = vpop.f32.mrf.mxu0
        %v1004 = vadd.f32 0.0, %v1003
        %1005 = vdwg.mxu0
        %1008 = vrot.lane.b32.xlu0 %v1002, 64
        %v1009 = vpop.permute.xlu0 %1008
        %1010 = vrot.lane.b32.xlu0 %v1004, 64
        %v1011 = vpop.permute.xlu0 %1010
        %vm1014 = vcmask 785920
        %1015 = vst.msk [vmem:[#allocation2] sm:$0xff] %vm1014, %v1009
        %1016 = vst.msk [vmem:[#allocation2 + $0x8] sm:$0xff] %vm1014, %v1011
        %1017 = vrot.lane.b32.xlu0 %v635, 96
        %v1018 = vpop.permute.xlu0 %1017
        %1019 = vrot.lane.b32.xlu0 %v636, 96
        %v1020 = vpop.permute.xlu0 %1019
        %v1023 = vmul.f32 %v633, %v1018
        %v1024 = vmul.f32 %v634, %v1020
        %v1025 = vsel %vm655, %v650, %v894
        %v1026 = vsel %vm655, %v652, %v896
        %v1027 = vmul.f32 %v1025, %v637
        %v1028 = vmul.f32 %v1026, %v638
        %1031 = vrot.lane.b32.xlu0 %v1027, 96
        %v1032 = vpop.permute.xlu0 %1031
        %1033 = vrot.lane.b32.xlu0 %v1028, 96
        %v1034 = vpop.permute.xlu0 %1033
        %v1037 = vadd.f32 %v1023, %v1032
        %v1038 = vadd.f32 %v1024, %v1034
        %v1039 = vmul.f32 %v615, %v1018
        %v1040 = vmul.f32 %v617, %v1020
        %v1041 = vsel %vm655, %v673, %v916
        %v1042 = vsel %vm655, %v675, %v918
        %v1043 = vmul.f32 %v1041, %v637
        %v1044 = vmul.f32 %v1042, %v638
        %1047 = vrot.lane.b32.xlu0 %v1043, 96
        %v1048 = vpop.permute.xlu0 %1047
        %1049 = vrot.lane.b32.xlu0 %v1044, 96
        %v1050 = vpop.permute.xlu0 %1049
        %v1053 = vadd.f32 %v1039, %v1048
        %v1054 = vadd.f32 %v1040, %v1050
        %v1055 = vpack.c.bf16 %v1038, %v1037
        %v1056 = vpack.c.bf16 %v1054, %v1053
        %1058 = vrot.lane.b32.xlu0 %v1055, 32
        %v1059 = vpop.permute.xlu0 %1058
        %1061 = vrot.lane.b32.xlu0 %v1056, 32
        %v1062 = vpop.permute.xlu0 %1061
        %v1064 = vsel %vm686, %v1059, 0
        %v1067 = vsel %vm686, %v1062, 0
        %1069 = vmatpush.bf16.xpose.msra.mxu0 0
        %1070 = vmatpush.bf16.xpose.msra.mxu0 0
        %1071 = vmatpush.bf16.xpose.msra.mxu0 0
        %1072 = vmatpush.bf16.xpose.msra.mxu0 0
        %1073 = vmatpush.bf16.xpose.msra.mxu0 0
        %1074 = vmatpush.bf16.xpose.msra.mxu0 0
        %1075 = vmatpush.bf16.xpose.msra.mxu0 0
        %1076 = vmatpush.bf16.xpose.msra.mxu0 %v1067
        %1077 = vmatmul.bf16.gmra.mxu0 %v1064
        %v1078 = vpop.f32.mrf.mxu0
        %v1079 = vadd.f32 0.0, %v1078
        %v1080 = vpop.f32.mrf.mxu0
        %v1081 = vadd.f32 0.0, %v1080
        %1082 = vdwg.mxu0
        %v1083 = vsel %vm655, %v1079, -inf
        %1084 = vmax.xlane.f32.xlu0 %v1083
        %v1085 = vpop.xlane.xlu0 %1084
        %v1086 = vsel %vm655, %v1081, -inf
        %1087 = vmax.xlane.f32.xlu0 %v1086
        %v1088 = vpop.xlane.xlu0 %1087
        %v1089 = vsub.f32 %v1079, %v1085
        %v1090 = vsub.f32 %v1081, %v1088
        %v1091 = vmul.f32 %v1089, 1.442695
        %v1092 = vpow.pop %v1091
        %v1093 = vmul.f32 %v1090, 1.442695
        %v1094 = vpow.pop %v1093
        %v1095 = vsel %vm655, %v1092, 0.0
        %1096 = vadd.xlane.f32.xlu0 %v1095
        %v1097 = vpop.xlane.xlu0 %1096
        %v1098 = vsel %vm655, %v1094, 0.0
        %1099 = vadd.xlane.f32.xlu0 %v1098
        %v1100 = vpop.xlane.xlu0 %1099
        %v1101 = vrcp.pop %v1097
        %v1102 = vrcp.pop %v1100
        %v1103 = vmul.f32 %v1092, %v1101
        %v1104 = vmul.f32 %v1094, %v1102
        %v1105 = vpack.c.bf16 %v1104, %v1103
        %1106 = vrot.lane.b32.xlu0 %v730, 32
        %v1107 = vpop.permute.xlu0 %1106
        %v1110 = vsel %vm655, %v1105, 0
        %1112 = vmatpush.bf16.msra.mxu0 0
        %1113 = vmatpush.bf16.msra.mxu0 0
        %1114 = vmatpush.bf16.msra.mxu0 0
        %1115 = vmatpush.bf16.msra.mxu0 0
        %1116 = vmatpush.bf16.msra.mxu0 0
        %1117 = vmatpush.bf16.msra.mxu0 0
        %1118 = vmatpush.bf16.msra.mxu0 0
        %1119 = vmatpush.bf16.msra.mxu0 %v1107
        %1120 = vmatmul.bf16.gmra.mxu0 %v1110
        %v1121 = vpop.f32.mrf.mxu0
        %v1122 = vadd.f32 0.0, %v1121
        %v1123 = vpop.f32.mrf.mxu0
        %v1124 = vadd.f32 0.0, %v1123
        %1125 = vdwg.mxu0
        %1128 = vrot.lane.b32.xlu0 %v1122, 96
        %v1129 = vpop.permute.xlu0 %1128
        %1130 = vrot.lane.b32.xlu0 %v1124, 96
        %v1131 = vpop.permute.xlu0 %1130
        %vm1134 = vcmask 1048320
        %1135 = vst.msk [vmem:[#allocation2] sm:$0xff] %vm1134, %v1129
        %1136 = vst.msk [vmem:[#allocation2 + $0x8] sm:$0xff] %vm1134, %v1131
        %v1137 = vld [vmem:[#allocation2] sm:$0xff]
        %v1138 = vld [vmem:[#allocation2 + $0x8] sm:$0xff]
        %v1139 = vpack.c.bf16 %v1138, %v1137
        %v1140 = vld [vmem:[#allocation9] sm:$0xf]
        %v1141 = vld [vmem:[#allocation9 + $0x4] sm:$0xf]
        %v1142 = vld [vmem:[#allocation9 + $0x8] sm:$0xf]
        %v1143 = vld [vmem:[#allocation9 + $0xc] sm:$0xf]
        %v1144 = vld [vmem:[#allocation9 + $0x10] sm:$0xf]
        %v1145 = vld [vmem:[#allocation9 + $0x14] sm:$0xf]
        %v1146 = vld [vmem:[#allocation9 + $0x18] sm:$0xf]
        %v1147 = vld [vmem:[#allocation9 + $0x1c] sm:$0xf]
        %v1148 = vld [vmem:[#allocation9 + $0x20] sm:$0xf]
        %v1149 = vld [vmem:[#allocation9 + $0x24] sm:$0xf]
        %v1150 = vld [vmem:[#allocation9 + $0x28] sm:$0xf]
        %v1151 = vld [vmem:[#allocation9 + $0x2c] sm:$0xf]
        %v1152 = vld [vmem:[#allocation9 + $0x30] sm:$0xf]
        %v1153 = vld [vmem:[#allocation9 + $0x34] sm:$0xf]
        %v1154 = vld [vmem:[#allocation9 + $0x38] sm:$0xf]
        %v1155 = vld [vmem:[#allocation9 + $0x3c] sm:$0xf]
        %v1172 = vunpack.c.l.b16 %v1140
        %v1173 = vunpack.c.l.b16 %v1141
        %v1174 = vunpack.c.l.b16 %v1142
        %v1175 = vunpack.c.l.b16 %v1143
        %v1176 = vunpack.c.l.b16 %v1144
        %v1177 = vunpack.c.l.b16 %v1145
        %v1178 = vunpack.c.l.b16 %v1146
        %v1179 = vunpack.c.l.b16 %v1147
        %v1180 = vunpack.c.l.b16 %v1148
        %v1181 = vunpack.c.l.b16 %v1149
        %v1182 = vunpack.c.l.b16 %v1150
        %v1183 = vunpack.c.l.b16 %v1151
        %v1184 = vunpack.c.l.b16 %v1152
        %v1185 = vunpack.c.l.b16 %v1153
        %v1186 = vunpack.c.l.b16 %v1154
        %v1187 = vunpack.c.l.b16 %v1155
        %v1188 = vpack.c.b16 %v1173, %v1172
        %v1189 = vpack.c.b16 %v1175, %v1174
        %v1190 = vpack.c.b16 %v1177, %v1176
        %v1191 = vpack.c.b16 %v1179, %v1178
        %v1192 = vpack.c.b16 %v1181, %v1180
        %v1193 = vpack.c.b16 %v1183, %v1182
        %v1194 = vpack.c.b16 %v1185, %v1184
        %v1195 = vpack.c.b16 %v1187, %v1186
        %1204 = vmatpush.bf16.msra.mxu0 %v1195
        %1205 = vmatpush.bf16.msra.mxu0 %v1194
        %1206 = vmatpush.bf16.msra.mxu0 %v1193
        %1207 = vmatpush.bf16.msra.mxu0 %v1192
        %1208 = vmatpush.bf16.msra.mxu0 %v1191
        %1209 = vmatpush.bf16.msra.mxu0 %v1190
        %1210 = vmatpush.bf16.msra.mxu0 %v1189
        %1211 = vmatpush.bf16.msra.mxu0 %v1188
        %1212 = vmatmul.bf16.gmra.mxu0 %v1139
        %v1213 = vpop.f32.mrf.mxu0
        %v1214 = vadd.f32 0.0, %v1213
        %v1215 = vpop.f32.mrf.mxu0
        %v1216 = vadd.f32 0.0, %v1215
        %1217 = vdwg.mxu0
        %v1218 = vperm.slane %v369, 2
        %v1219 = vmul.f32 %v1218, %v1214
        %v1220 = vmul.f32 %v1218, %v1216
        %v1221 = vadd.f32 %v367, %v1219
        %v1222 = vadd.f32 %v368, %v1220
        %1223 = vst [vmem:[%s361] sm:$0xff] %v1221
        %1224 = vst [vmem:[%s361 + $0x8] sm:$0xff] %v1222
        %s1225 = sand.u32 %s191, 1
        %s1226 = scalar_lea.sflag [#allocation5], %s1225
        %s1227 = sand.u32 %s191, 1
        %s1228 = smul.addr %s1227, 16
        %s1229 = scalar_lea.vmem [#allocation11], %s1228
        // Predicated region
        $region65: #{tpu_custom_call.1} parent=47 // pred_check
          %p1230 = pneg %p201
        $region66: #{tpu_custom_call.1} parent=47 // pred_check_branch
          %1232 = sbr.rel (%p1230) target = $region68
        $region67: #{tpu_custom_call.1} parent=47 // pred_region
          %1234 = vsyncadd %s1226, 0
          %s1235 = smul.addr %s26, 2
          %s1236 = smul.addr %s1235, 8
          %s1237 = scalar_lea.hbm %s7, %s1236
          %s1238 = sshll.u32 %s1229, 4
          %s1239 = int_to_ptr.vmem [resolvable:$true] %s1238
          %s1240 = sshll.u32 %s1237, 4
          %s1241 = int_to_ptr.hbm [resolvable:$true] %s1240
          %1246 = dma.vmem_to_hbm [thread:$0]  %s1239, 256, %s1241, %s1226, 128, 128, 8
        $region68: #{tpu_custom_call.1} parent=47 // pred_fallthru
          _
      $region48: #{tpu_custom_call.1} parent=5 // pred_fallthru
        _
      %p1247 = scmp.le.s32.totalorder 2, %s21
      // Predicated region
      $region69: #{tpu_custom_call.1} parent=5 // pred_check
        %p1248 = pneg %p1247
      $region70: #{tpu_custom_call.1} parent=5 // pred_check_branch
        %1250 = sbr.rel (%p1248) target = $region72
      $region71: #{tpu_custom_call.1} parent=5 // pred_region
        %s1251 = ssub.s32 %s21, 2
        // Predicated region
        $region73: #{tpu_custom_call.1} parent=71 // pred_check
          %p1252 = pneg %p207
        $region74: #{tpu_custom_call.1} parent=71 // pred_check_branch
          %1254 = sbr.rel (%p1252) target = $region76
        $region75: #{tpu_custom_call.1} parent=71 // pred_region
          %s1255 = sand.u32 %s192, 1
          %s1256 = scalar_lea.sflag [#allocation5], %s1255
          %s1257 = sand.u32 %s192, 1
          %s1258 = smul.addr %s1257, 16
          %s1259 = scalar_lea.vmem [#allocation11], %s1258
          %1261 = dma.done %s1256, 256
        $region76: #{tpu_custom_call.1} parent=71 // pred_fallthru
          _
      $region72: #{tpu_custom_call.1} parent=5 // pred_fallthru
        _
    $region6: #{tpu_custom_call.1} parent=1 // loop_footer
      %s25 = sadd.s32 1, %s21
    $region7: #{tpu_custom_call.1} parent=1 // loop_footer_branch
      %20 = sbr.rel target = $region3
    $region8: #{tpu_custom_call.1} parent=1 // loop_exit
      _
    %1262 = vsyncpa [#allocation4], 1
    %s1263 = scalar_lea.sflag [#allocation4], 1
    %1264 = vsyncpa %s1263, 1
    %1265 = vsyncpa [#allocation7], 1
    %1266 = vsyncpa [#allocation10], 1
    %1267 = vsyncpa [#allocation5], 1
    %s1268 = scalar_lea.sflag [#allocation5], 1
    %1269 = vsyncpa %s1268, 1

</llo_original>
